<compile_context>
chip_gen: v6e
topology: v6e:2x2x1
jax: 0.10.0
libtpu: 0.0.40
codegen_flags: <defaults>
</compile_context>

<pallas_src>
import functools

import jax
import jax.numpy as jnp
from jax import lax
from jax.experimental import pallas as pl
from jax.experimental.pallas import tpu as pltpu


# --------------------------------------------------------------------------- #
# Kernel 1: fused convd (Conv+BN+SiLU)  +  RFA (grouped 1x1 -> softmax -> Conv+BN+SiLU)
# --------------------------------------------------------------------------- #
def _convd_rfa_kernel(patches_ref, pooled_ref, wc_ref, bc_ref, gwt_ref, wr_ref,
                      br_ref, x3_ref, w1_ref):
    """One (batch, spatial-tile) grid step.

    patches_ref: (C1*k*k, tn) bf16  im2col patches (all taps folded into K)
    pooled_ref : (C1, tn)     f32   kxk avg-pool of x
    wc_ref     : (C2, C1*k*k) bf16  convd weight, BN scale folded    (resident)
    bc_ref     : (C2, 1)      f32   convd BN shift                   (resident)
    gwt_ref    : (k*k, C1)    f32   RFA grouped-1x1 weight           (resident)
    wr_ref     : (C1, C2, k*k) bf16 RFA conv weight, BN scale folded (resident)
    br_ref     : (C2, 1)      f32   RFA BN shift                     (resident)
    x3_ref     : (C2, tn)     bf16  convd output tile (lane-dense)
    w1_ref     : (C2, tn)     bf16  RFA output tile   (lane-dense)
    """
    c1 = pooled_ref.shape[0]

    # ---- convd: ONE fat MXU contraction over K = C1*k*k, lane-dense output ----
    acc = jnp.dot(wc_ref[...], patches_ref[...], preferred_element_type=jnp.float32)
    y = acc + bc_ref[...]
    x3_ref[...] = (y * jax.nn.sigmoid(y)).astype(x3_ref.dtype)

    # ---- RFA: grouped 1x1 + softmax over k*k (EUP) + matmul, all fused ----
    pooled = pooled_ref[...]                      # (C1, tn) f32
    gwt = gwt_ref[...]                            # (k*k, C1) f32
    accr = jnp.zeros_like(acc)
    for c in range(c1):                           # static unroll (C1 is small)
        p_c = pooled[c:c + 1, :]                  # (1, tn)
        feat = gwt[:, c:c + 1] * p_c              # (k*k, tn) outer-product broadcast
        m = jnp.max(feat, axis=0, keepdims=True)
        e = jnp.exp(feat - m)
        s = jnp.sum(e, axis=0, keepdims=True)
        soft = (e / s).astype(jnp.bfloat16)
        # TODO(synk): for larger C1, concatenate per-channel softmax blocks and issue
        # a single K=C1*k*k matmul instead of C1 small ones.
        accr = accr + jnp.dot(wr_ref[c], soft, preferred_element_type=jnp.float32)
    yr = accr + br_ref[...]
    w1_ref[...] = (yr * jax.nn.sigmoid(yr)).astype(w1_ref.dtype)


# --------------------------------------------------------------------------- #
# Kernel 2: SpatialAttention (channel max/mean -> kxk conv -> sigmoid) fused with
#           the final combine  out = x3 * (1 + weight1 + weight2), emitted in NCHW.
# --------------------------------------------------------------------------- #
def _sa_combine_kernel(x3_ref, w1_ref, saw_ref, sab_ref, out_ref, mxp_ref, avp_ref,
                       *, k, q):
    """One batch element per grid step.

    x3_ref  : (C2, Ho, Wo) bf16     w1_ref : (C2, Ho, Wo) bf16
    saw_ref : (2*k*k,) f32 SMEM     sab_ref: (1,) f32 SMEM
    out_ref : (C2, Ho, Wo) f32      (final NCHW output, no transpose needed)
    mxp/avp : (Ho+2q, Wo+2q) f32 VMEM scratch (zero-padded channel stats)
    """
    c2, ho, wo = out_ref.shape
    x3 = x3_ref[...].astype(jnp.float32)

    # Zero-padded channel max / mean maps (zero pad == the conv's zero padding).
    mxp_ref[...] = jnp.zeros_like(mxp_ref)
    avp_ref[...] = jnp.zeros_like(avp_ref)
    mxp_ref[q:q + ho, q:q + wo] = jnp.max(x3, axis=0)
    avp_ref[q:q + ho, q:q + wo] = jnp.sum(x3, axis=0) * (1.0 / c2)

    # 2->1 channel kxk conv as 2*k*k scalar * tile FMAs on the VPU, + bias + sigmoid.
    acc = jnp.zeros((ho, wo), jnp.float32) + sab_ref[0]
    for i in range(k):
        for j in range(k):
            acc = (acc
                   + saw_ref[i * k + j] * mxp_ref[i:i + ho, j:j + wo]
                   + saw_ref[k * k + i * k + j] * avp_ref[i:i + ho, j:j + wo])
    weight2 = jax.nn.sigmoid(acc)                 # (Ho, Wo)

    out_ref[...] = x3 * (1.0 + w1_ref[...].astype(jnp.float32) + weight2[None, :, :])


# --------------------------------------------------------------------------- #
# Wrappers
# --------------------------------------------------------------------------- #
def _pick_tile_n(n, c2):
    """Largest lane-dense (multiple-of-128) spatial tile dividing N, capped so the
    f32 accumulators (~ceil(c2/8) * tn/128 vreg tiles) stay comfortably in vregs.
    No forced >=2-tile heuristic: the batch grid axis provides pipelining."""
    cap = max(128, (16 * 128 * 8) // max(c2, 8))
    best = 0
    t = 128
    while t <= min(n, cap):
        if n % t == 0:
            best = t
        t += 128
    return best if best else n        # no 128-divisor -> single full-extent tile


def _convd_rfa(patches, pooled, wc, bc, gwt, wr, br):
    B, K, N = patches.shape
    c1 = pooled.shape[1]
    c2 = wc.shape[0]
    kk = gwt.shape[0]
    tn = _pick_tile_n(N, c2)
    grid = (B, N // tn)
    x3, w1 = pl.pallas_call(
        _convd_rfa_kernel,
        out_shape=(jax.ShapeDtypeStruct((B, c2, N), jnp.bfloat16),
                   jax.ShapeDtypeStruct((B, c2, N), jnp.bfloat16)),
        grid=grid,
        in_specs=[
            pl.BlockSpec((None, K, tn), lambda bi, ni: (bi, 0, ni)),
            pl.BlockSpec((None, c1, tn), lambda bi, ni: (bi, 0, ni)),
            pl.BlockSpec((c2, K), lambda bi, ni: (0, 0)),          # resident
            pl.BlockSpec((c2, 1), lambda bi, ni: (0, 0)),          # resident
            pl.BlockSpec((kk, c1), lambda bi, ni: (0, 0)),         # resident
            pl.BlockSpec((c1, c2, kk), lambda bi, ni: (0, 0, 0)),  # resident
            pl.BlockSpec((c2, 1), lambda bi, ni: (0, 0)),          # resident
        ],
        out_specs=(pl.BlockSpec((None, c2, tn), lambda bi, ni: (bi, 0, ni)),
                   pl.BlockSpec((None, c2, tn), lambda bi, ni: (bi, 0, ni))),
        compiler_params=pltpu.CompilerParams(
            dimension_semantics=("parallel", "parallel"),
            # Tiles are tiny; 32 MiB scoped limit is valid on v5e / v6e / v7x alike.
            vmem_limit_bytes=32 * 1024 * 1024),
    )(patches, pooled, wc, bc, gwt, wr, br)
    return x3, w1


def _sa_combine(x3, w1, saw, sab, k):
    B, C2, Ho, Wo = x3.shape
    q = k // 2
    kernel = functools.partial(_sa_combine_kernel, k=k, q=q)
    # TODO(synk): for very large feature maps, tile rows with a +/- (k//2) halo
    # instead of keeping the full per-batch image resident.
    return pl.pallas_call(
        kernel,
        out_shape=jax.ShapeDtypeStruct((B, C2, Ho, Wo), jnp.float32),
        grid=(B,),
        in_specs=[
            pl.BlockSpec((None, C2, Ho, Wo), lambda bi: (bi, 0, 0, 0)),
            pl.BlockSpec((None, C2, Ho, Wo), lambda bi: (bi, 0, 0, 0)),
            pl.BlockSpec(memory_space=pltpu.MemorySpace.SMEM),
            pl.BlockSpec(memory_space=pltpu.MemorySpace.SMEM),
        ],
        out_specs=pl.BlockSpec((None, C2, Ho, Wo), lambda bi: (bi, 0, 0, 0)),
        scratch_shapes=[pltpu.VMEM((Ho + 2 * q, Wo + 2 * q), jnp.float32),
                        pltpu.VMEM((Ho + 2 * q, Wo + 2 * q), jnp.float32)],
        compiler_params=pltpu.CompilerParams(
            dimension_semantics=("parallel",),
            vmem_limit_bytes=32 * 1024 * 1024),
    )(x3, w1, saw, sab)


def _im2col_nchw(x, k, stride, padding):
    """(B, C, H, W) -> (B, C*k*k, Ho*Wo), tap index i*k+j.  Any stride>1 is handled
    here in XLA (strided slicing), so the Pallas kernel never strides."""
    B, C, H, W = x.shape
    xp = jnp.pad(x, ((0, 0), (0, 0), (padding, padding), (padding, padding)))
    Hp, Wp = H + 2 * padding, W + 2 * padding
    Ho = (Hp - k) // stride + 1
    Wo = (Wp - k) // stride + 1
    taps = []
    for i in range(k):
        for j in range(k):
            taps.append(lax.slice(xp, (0, 0, i, j),
                                  (B, C, i + (Ho - 1) * stride + 1,
                                   j + (Wo - 1) * stride + 1),
                                  (1, 1, stride, stride)))
    pat = jnp.stack(taps, axis=2)                  # (B, C, k*k, Ho, Wo)
    return pat.reshape(B, C * k * k, Ho * Wo), Ho, Wo


def _avg_pool_nchw(x, k, stride):
    # PyTorch AvgPool2d default (count_include_pad=True): zero pad, divide by k*k.
    pad = k // 2
    s = lax.reduce_window(x, jnp.array(0.0, x.dtype), lax.add,
                          (1, 1, k, k), (1, 1, stride, stride),
                          ((0, 0), (0, 0), (pad, pad), (pad, pad)))
    return s / float(k * k)


@functools.partial(jax.jit, static_argnums=(2, 3, 4))
def rfsw_forward(x_nchw, params, kernel_size, stride, padding):
    eps = 1e-5
    k = kernel_size
    B, C1, H, W = x_nchw.shape
    C2 = params["convd_w"].shape[0]
    x = x_nchw.astype(jnp.float32)

    # ---- fold BN scale into the conv weights (kernel epilogue = bias + SiLU) ----
    sc = params["convd_g"] / jnp.sqrt(params["convd_v"] + eps)
    wc = (params["convd_w"].astype(jnp.float32) * sc[:, None, None, None])
    wc = wc.reshape(C2, C1 * k * k).astype(jnp.bfloat16)
    bc = (params["convd_b"] - params["convd_m"] * sc).astype(jnp.float32).reshape(C2, 1)

    sr = params["rfa_g"] / jnp.sqrt(params["rfa_v"] + eps)
    wr = (params["rfa_w"].astype(jnp.float32) * sr[:, None, None, None])
    wr = jnp.transpose(wr.reshape(C2, C1, k * k), (1, 0, 2)).astype(jnp.bfloat16)
    br = (params["rfa_b"] - params["rfa_m"] * sr).astype(jnp.float32).reshape(C2, 1)

    gwt = jnp.transpose(params["rfa_gw"].reshape(C1, k * k)).astype(jnp.float32)
    saw = params["sa_w"].astype(jnp.float32).reshape(2 * k * k)
    sab = params["sa_bias"].astype(jnp.float32).reshape(1)

    # ---- wrapper-side im2col / pooling: spatial dim lands in lanes ----
    patches, Ho, Wo = _im2col_nchw(x, k, stride, padding)
    patches = patches.astype(jnp.bfloat16)
    pooled = _avg_pool_nchw(x, k, stride)
    assert pooled.shape[2:] == (Ho, Wo), "RFA / convd output size mismatch"
    pooled = pooled.reshape(B, C1, Ho * Wo)

    # ---- Pallas kernel 1: convd + RFA (softmax fused), bf16 outputs ----
    x3_flat, w1_flat = _convd_rfa(patches, pooled, wc, bc, gwt, wr, br)

    # (B, C2, N) -> (B, C2, Ho, Wo) is a free row-major reshape (no transpose).
    x3 = x3_flat.reshape(B, C2, Ho, Wo)
    w1 = w1_flat.reshape(B, C2, Ho, Wo)

    # ---- Pallas kernel 2: SpatialAttention + final combine, NCHW out ----
    return _sa_combine(x3, w1, saw, sab, k)


# --------------------------------------------------------------------------- #
# Pure-JAX reference (literal port of the PyTorch forward; conv operands in bf16
# to match the kernel's MXU precision, f32 accumulation, same bf16 rounding points)
# --------------------------------------------------------------------------- #
def rfsw_reference(x, p, k, stride, padding, eps=1e-5):
    f32, bf16 = jnp.float32, jnp.bfloat16
    C1 = x.shape[1]
    x = x.astype(f32)

    def conv_bn_silu(inp, w, g, b, m, v, s, pad):
        scale = g / jnp.sqrt(v + eps)
        wf = (w * scale[:, None, None, None]).astype(bf16)
        y = lax.conv_general_dilated(inp.astype(bf16), wf, (s, s),
                                     ((pad, pad), (pad, pad)),
                                     dimension_numbers=("NCHW", "OIHW", "NCHW"),
                                     preferred_element_type=f32)
        y = y + (b - m * scale)[None, :, None, None]
        return y * jax.nn.sigmoid(y)

    # convd
    x3 = conv_bn_silu(x, p["convd_w"], p["convd_g"], p["convd_b"],
                      p["convd_m"], p["convd_v"], stride, padding).astype(bf16)

    # RFA: avg-pool -> grouped 1x1 -> softmax -> rearrange -> Conv(k, s=k, p=0)
    pooled = lax.reduce_window(x, jnp.array(0.0, f32), lax.add,
                               (1, 1, k, k), (1, 1, stride, stride),
                               ((0, 0), (0, 0), (k // 2, k // 2), (k // 2, k // 2))
                               ) / float(k * k)
    gw = p["rfa_gw"].reshape(C1, k * k)
    feat = pooled[:, :, None, :, :] * gw[None, :, :, None, None]   # (B,C1,k2,h,w)
    soft = jax.nn.softmax(feat, axis=2)
    b_, c_, _, h_, w_ = soft.shape
    conv_data = soft.reshape(b_, c_, k, k, h_, w_)
    conv_data = jnp.transpose(conv_data, (0, 1, 4, 2, 5, 3)).reshape(b_, c_, h_ * k, w_ * k)
    w1 = conv_bn_silu(conv_data, p["rfa_w"], p["rfa_g"], p["rfa_b"],
                      p["rfa_m"], p["rfa_v"], k, 0).astype(bf16)

    # SpatialAttention(x3) + combine
    x3f = x3.astype(f32)
    mx = jnp.max(x3f, axis=1, keepdims=True)
    av = jnp.mean(x3f, axis=1, keepdims=True)
    sa_in = jnp.concatenate([mx, av], axis=1)
    w2 = lax.conv_general_dilated(sa_in, p["sa_w"].astype(f32), (1, 1),
                                  ((k // 2, k // 2), (k // 2, k // 2)),
                                  dimension_numbers=("NCHW", "OIHW", "NCHW"),
                                  precision=lax.Precision.HIGHEST)
    w2 = jax.nn.sigmoid(w2 + p["sa_bias"][None, :, None, None])
    return x3f * (1.0 + w1.astype(f32) + w2)


if __name__ == "__main__":
    # RFSW(in_channel=4, out_channel=8, kernel_size=3, stride=1, padding=1)
    B, C1, H, W = 2, 4, 16, 16
    C2, K, S, P = 8, 3, 1, 1

    keys = jax.random.split(jax.random.PRNGKey(0), 14)
    x = jax.random.normal(keys[0], (B, C1, H, W), jnp.float32)
    params = dict(
        convd_w=0.2 * jax.random.normal(keys[1], (C2, C1, K, K), jnp.float32),
        convd_g=1.0 + 0.1 * jax.random.normal(keys[2], (C2,), jnp.float32),
        convd_b=0.1 * jax.random.normal(keys[3], (C2,), jnp.float32),
        convd_m=0.1 * jax.random.normal(keys[4], (C2,), jnp.float32),
        convd_v=jnp.abs(1.0 + 0.1 * jax.random.normal(keys[5], (C2,), jnp.float32)),
        rfa_gw=jax.random.normal(keys[6], (C1 * K * K,), jnp.float32),
        rfa_w=0.2 * jax.random.normal(keys[7], (C2, C1, K, K), jnp.float32),
        rfa_g=1.0 + 0.1 * jax.random.normal(keys[8], (C2,), jnp.float32),
        rfa_b=0.1 * jax.random.normal(keys[9], (C2,), jnp.float32),
        rfa_m=0.1 * jax.random.normal(keys[10], (C2,), jnp.float32),
        rfa_v=jnp.abs(1.0 + 0.1 * jax.random.normal(keys[11], (C2,), jnp.float32)),
        sa_w=0.2 * jax.random.normal(keys[12], (1, 2, K, K), jnp.float32),
        sa_bias=0.1 * jax.random.normal(keys[13], (1,), jnp.float32),
    )

    out = jax.block_until_ready(rfsw_forward(x, params, K, S, P))
    ref = rfsw_reference(x, params, K, S, P)

    assert out.shape == (B, C2, H, W), out.shape
    max_err = float(jnp.max(jnp.abs(out - ref)))
    assert jnp.allclose(out, ref, atol=1e-2, rtol=1e-2), max_err
    print("KERNEL_OK")
</pallas_src>

<mosaic_0001>
module attributes {stable_mosaic.version = 11 : i64} {
  func.func @_convd_rfa_kernel(%arg0: i32, %arg1: i32, %arg2: memref<1x36x256xbf16, #tpu.memory_space<vmem>>, %arg3: memref<1x4x256xf32, #tpu.memory_space<vmem>>, %arg4: memref<8x36xbf16, #tpu.memory_space<vmem>>, %arg5: memref<8x1xf32, #tpu.memory_space<vmem>>, %arg6: memref<9x4xf32, #tpu.memory_space<vmem>>, %arg7: memref<4x8x9xbf16, #tpu.memory_space<vmem>>, %arg8: memref<8x1xf32, #tpu.memory_space<vmem>>, %arg9: memref<1x8x256xbf16, #tpu.memory_space<vmem>>, %arg10: memref<1x8x256xbf16, #tpu.memory_space<vmem>>) attributes {dimension_semantics = [#tpu.dimension_semantics<parallel>, #tpu.dimension_semantics<parallel>], iteration_bounds = array<i64: 2, 1>, scalar_prefetch = 0 : i64, scratch_operands = 0 : i64, tpu.core_type = #tpu.core_type<tc>, window_params = [{transform_indices = @transform_0, window_bounds = array<i64: 1, 36, 256>}, {transform_indices = @transform_1, window_bounds = array<i64: 1, 4, 256>}, {pipeline_mode = #tpu.pipeline_mode<synchronous>, transform_indices = @transform_2, window_bounds = array<i64: 8, 36>}, {pipeline_mode = #tpu.pipeline_mode<synchronous>, transform_indices = @transform_3, window_bounds = array<i64: 8, 1>}, {pipeline_mode = #tpu.pipeline_mode<synchronous>, transform_indices = @transform_4, window_bounds = array<i64: 9, 4>}, {pipeline_mode = #tpu.pipeline_mode<synchronous>, transform_indices = @transform_5, window_bounds = array<i64: 4, 8, 9>}, {pipeline_mode = #tpu.pipeline_mode<synchronous>, transform_indices = @transform_6, window_bounds = array<i64: 8, 1>}, {transform_indices = @transform_7, window_bounds = array<i64: 1, 8, 256>}, {transform_indices = @transform_8, window_bounds = array<i64: 1, 8, 256>}]} {
    %c0 = arith.constant 0 : index
    %c0_0 = arith.constant 0 : index
    %0 = vector.load %arg4[%c0, %c0_0] : memref<8x36xbf16, #tpu.memory_space<vmem>>, vector<8x36xbf16>
    %c0_1 = arith.constant 0 : index
    %c0_2 = arith.constant 0 : index
    %c0_3 = arith.constant 0 : index
    %1 = vector.load %arg2[%c0_1, %c0_2, %c0_3] : memref<1x36x256xbf16, #tpu.memory_space<vmem>>, vector<1x36x256xbf16>
    %2 = vector.shape_cast %1 : vector<1x36x256xbf16> to vector<36x256xbf16>
    %cst = arith.constant dense<0.000000e+00> : vector<8x256xf32>
    %3 = tpu.matmul %0, %2, %cst {dimension_numbers = #tpu.dot_dimension_numbers<[1], [0], [0], [1], [0, 0, 1, 1], [], []>} : vector<8x36xbf16>, vector<36x256xbf16>, vector<8x256xf32> -> vector<8x256xf32>
    %c0_4 = arith.constant 0 : index
    %c0_5 = arith.constant 0 : index
    %4 = vector.load %arg5[%c0_4, %c0_5] : memref<8x1xf32, #tpu.memory_space<vmem>>, vector<8x1xf32>
    %5 = vector.broadcast %4 : vector<8x1xf32> to vector<8x256xf32>
    %6 = arith.addf %3, %5 : vector<8x256xf32>
    %7 = arith.negf %6 : vector<8x256xf32>
    %8 = math.exp %7 : vector<8x256xf32>
    %cst_6 = arith.constant 1.000000e+00 : f32
    %9 = vector.broadcast %cst_6 : f32 to vector<8x256xf32>
    %10 = arith.addf %9, %8 : vector<8x256xf32>
    %11 = arith.divf %9, %10 : vector<8x256xf32>
    %12 = arith.mulf %6, %11 : vector<8x256xf32>
    %13 = arith.truncf %12 : vector<8x256xf32> to vector<8x256xbf16>
    %c0_7 = arith.constant 0 : index
    %c0_8 = arith.constant 0 : index
    %c0_9 = arith.constant 0 : index
    %14 = vector.load %arg9[%c0_7, %c0_8, %c0_9] : memref<1x8x256xbf16, #tpu.memory_space<vmem>>, vector<1x8x256xbf16>
    %15 = vector.shape_cast %14 : vector<1x8x256xbf16> to vector<8x256xbf16>
    %16 = vector.shape_cast %13 : vector<8x256xbf16> to vector<1x8x256xbf16>
    tpu.vector_store %arg9[%c0_7, %c0_8, %c0_9], %16 {strides = array<i32>} : memref<1x8x256xbf16, #tpu.memory_space<vmem>>, vector<1x8x256xbf16>,
    %c0_10 = arith.constant 0 : index
    %c0_11 = arith.constant 0 : index
    %c0_12 = arith.constant 0 : index
    %17 = vector.load %arg3[%c0_10, %c0_11, %c0_12] : memref<1x4x256xf32, #tpu.memory_space<vmem>>, vector<1x4x256xf32>
    %18 = vector.shape_cast %17 : vector<1x4x256xf32> to vector<4x256xf32>
    %c0_13 = arith.constant 0 : index
    %c0_14 = arith.constant 0 : index
    %19 = vector.load %arg6[%c0_13, %c0_14] : memref<9x4xf32, #tpu.memory_space<vmem>>, vector<9x4xf32>
    %cst_15 = arith.constant 0.000000e+00 : f32
    %20 = vector.broadcast %cst_15 : f32 to vector<8x256xf32>
    %21 = vector.extract_strided_slice %18 {offsets = [0, 0], sizes = [1, 256], strides = [1, 1]} : vector<4x256xf32> to vector<1x256xf32>
    %22 = vector.extract_strided_slice %19 {offsets = [0, 0], sizes = [9, 1], strides = [1, 1]} : vector<9x4xf32> to vector<9x1xf32>
    %23 = vector.broadcast %22 : vector<9x1xf32> to vector<9x256xf32>
    %24 = vector.broadcast %21 : vector<1x256xf32> to vector<9x256xf32>
    %25 = arith.mulf %23, %24 : vector<9x256xf32>
    %cst_16 = arith.constant dense<0xFF800000> : vector<256xf32>
    %26 = vector.multi_reduction <maximumf>, %25, %cst_16 [0] : vector<9x256xf32> to vector<256xf32>
    %27 = vector.shape_cast %26 : vector<256xf32> to vector<1x256xf32>
    %28 = vector.broadcast %27 : vector<1x256xf32> to vector<9x256xf32>
    %29 = arith.subf %25, %28 : vector<9x256xf32>
    %30 = math.exp %29 : vector<9x256xf32>
    %cst_17 = arith.constant dense<0.000000e+00> : vector<256xf32>
    %31 = vector.multi_reduction <add>, %30, %cst_17 [0] : vector<9x256xf32> to vector<256xf32>
    %32 = vector.shape_cast %31 : vector<256xf32> to vector<1x256xf32>
    %33 = vector.broadcast %32 : vector<1x256xf32> to vector<9x256xf32>
    %34 = arith.divf %30, %33 : vector<9x256xf32>
    %35 = arith.truncf %34 : vector<9x256xf32> to vector<9x256xbf16>
    %c0_18 = arith.constant 0 : index
    %c0_19 = arith.constant 0 : index
    %c0_20 = arith.constant 0 : index
    %36 = vector.load %arg7[%c0_18, %c0_19, %c0_20] : memref<4x8x9xbf16, #tpu.memory_space<vmem>>, vector<1x8x9xbf16>
    %37 = vector.shape_cast %36 : vector<1x8x9xbf16> to vector<8x9xbf16>
    %cst_21 = arith.constant dense<0.000000e+00> : vector<8x256xf32>
    %38 = tpu.matmul %37, %35, %cst_21 {dimension_numbers = #tpu.dot_dimension_numbers<[1], [0], [0], [1], [0, 0, 1, 1], [], []>} : vector<8x9xbf16>, vector<9x256xbf16>, vector<8x256xf32> -> vector<8x256xf32>
    %39 = arith.addf %20, %38 : vector<8x256xf32>
    %40 = vector.extract_strided_slice %18 {offsets = [1, 0], sizes = [1, 256], strides = [1, 1]} : vector<4x256xf32> to vector<1x256xf32>
    %41 = vector.extract_strided_slice %19 {offsets = [0, 1], sizes = [9, 1], strides = [1, 1]} : vector<9x4xf32> to vector<9x1xf32>
    %42 = vector.broadcast %41 : vector<9x1xf32> to vector<9x256xf32>
    %43 = vector.broadcast %40 : vector<1x256xf32> to vector<9x256xf32>
    %44 = arith.mulf %42, %43 : vector<9x256xf32>
    %cst_22 = arith.constant dense<0xFF800000> : vector<256xf32>
    %45 = vector.multi_reduction <maximumf>, %44, %cst_22 [0] : vector<9x256xf32> to vector<256xf32>
    %46 = vector.shape_cast %45 : vector<256xf32> to vector<1x256xf32>
    %47 = vector.broadcast %46 : vector<1x256xf32> to vector<9x256xf32>
    %48 = arith.subf %44, %47 : vector<9x256xf32>
    %49 = math.exp %48 : vector<9x256xf32>
    %cst_23 = arith.constant dense<0.000000e+00> : vector<256xf32>
    %50 = vector.multi_reduction <add>, %49, %cst_23 [0] : vector<9x256xf32> to vector<256xf32>
    %51 = vector.shape_cast %50 : vector<256xf32> to vector<1x256xf32>
    %52 = vector.broadcast %51 : vector<1x256xf32> to vector<9x256xf32>
    %53 = arith.divf %49, %52 : vector<9x256xf32>
    %54 = arith.truncf %53 : vector<9x256xf32> to vector<9x256xbf16>
    %c1 = arith.constant 1 : index
    %c0_24 = arith.constant 0 : index
    %c0_25 = arith.constant 0 : index
    %55 = vector.load %arg7[%c1, %c0_24, %c0_25] : memref<4x8x9xbf16, #tpu.memory_space<vmem>>, vector<1x8x9xbf16>
    %56 = vector.shape_cast %55 : vector<1x8x9xbf16> to vector<8x9xbf16>
    %cst_26 = arith.constant dense<0.000000e+00> : vector<8x256xf32>
    %57 = tpu.matmul %56, %54, %cst_26 {dimension_numbers = #tpu.dot_dimension_numbers<[1], [0], [0], [1], [0, 0, 1, 1], [], []>} : vector<8x9xbf16>, vector<9x256xbf16>, vector<8x256xf32> -> vector<8x256xf32>
    %58 = arith.addf %39, %57 : vector<8x256xf32>
    %59 = vector.extract_strided_slice %18 {offsets = [2, 0], sizes = [1, 256], strides = [1, 1]} : vector<4x256xf32> to vector<1x256xf32>
    %60 = vector.extract_strided_slice %19 {offsets = [0, 2], sizes = [9, 1], strides = [1, 1]} : vector<9x4xf32> to vector<9x1xf32>
    %61 = vector.broadcast %60 : vector<9x1xf32> to vector<9x256xf32>
    %62 = vector.broadcast %59 : vector<1x256xf32> to vector<9x256xf32>
    %63 = arith.mulf %61, %62 : vector<9x256xf32>
    %cst_27 = arith.constant dense<0xFF800000> : vector<256xf32>
    %64 = vector.multi_reduction <maximumf>, %63, %cst_27 [0] : vector<9x256xf32> to vector<256xf32>
    %65 = vector.shape_cast %64 : vector<256xf32> to vector<1x256xf32>
    %66 = vector.broadcast %65 : vector<1x256xf32> to vector<9x256xf32>
    %67 = arith.subf %63, %66 : vector<9x256xf32>
    %68 = math.exp %67 : vector<9x256xf32>
    %cst_28 = arith.constant dense<0.000000e+00> : vector<256xf32>
    %69 = vector.multi_reduction <add>, %68, %cst_28 [0] : vector<9x256xf32> to vector<256xf32>
    %70 = vector.shape_cast %69 : vector<256xf32> to vector<1x256xf32>
    %71 = vector.broadcast %70 : vector<1x256xf32> to vector<9x256xf32>
    %72 = arith.divf %68, %71 : vector<9x256xf32>
    %73 = arith.truncf %72 : vector<9x256xf32> to vector<9x256xbf16>
    %c2 = arith.constant 2 : index
    %c0_29 = arith.constant 0 : index
    %c0_30 = arith.constant 0 : index
    %74 = vector.load %arg7[%c2, %c0_29, %c0_30] : memref<4x8x9xbf16, #tpu.memory_space<vmem>>, vector<1x8x9xbf16>
    %75 = vector.shape_cast %74 : vector<1x8x9xbf16> to vector<8x9xbf16>
    %cst_31 = arith.constant dense<0.000000e+00> : vector<8x256xf32>
    %76 = tpu.matmul %75, %73, %cst_31 {dimension_numbers = #tpu.dot_dimension_numbers<[1], [0], [0], [1], [0, 0, 1, 1], [], []>} : vector<8x9xbf16>, vector<9x256xbf16>, vector<8x256xf32> -> vector<8x256xf32>
    %77 = arith.addf %58, %76 : vector<8x256xf32>
    %78 = vector.extract_strided_slice %18 {offsets = [3, 0], sizes = [1, 256], strides = [1, 1]} : vector<4x256xf32> to vector<1x256xf32>
    %79 = vector.extract_strided_slice %19 {offsets = [0, 3], sizes = [9, 1], strides = [1, 1]} : vector<9x4xf32> to vector<9x1xf32>
    %80 = vector.broadcast %79 : vector<9x1xf32> to vector<9x256xf32>
    %81 = vector.broadcast %78 : vector<1x256xf32> to vector<9x256xf32>
    %82 = arith.mulf %80, %81 : vector<9x256xf32>
    %cst_32 = arith.constant dense<0xFF800000> : vector<256xf32>
    %83 = vector.multi_reduction <maximumf>, %82, %cst_32 [0] : vector<9x256xf32> to vector<256xf32>
    %84 = vector.shape_cast %83 : vector<256xf32> to vector<1x256xf32>
    %85 = vector.broadcast %84 : vector<1x256xf32> to vector<9x256xf32>
    %86 = arith.subf %82, %85 : vector<9x256xf32>
    %87 = math.exp %86 : vector<9x256xf32>
    %cst_33 = arith.constant dense<0.000000e+00> : vector<256xf32>
    %88 = vector.multi_reduction <add>, %87, %cst_33 [0] : vector<9x256xf32> to vector<256xf32>
    %89 = vector.shape_cast %88 : vector<256xf32> to vector<1x256xf32>
    %90 = vector.broadcast %89 : vector<1x256xf32> to vector<9x256xf32>
    %91 = arith.divf %87, %90 : vector<9x256xf32>
    %92 = arith.truncf %91 : vector<9x256xf32> to vector<9x256xbf16>
    %c3 = arith.constant 3 : index
    %c0_34 = arith.constant 0 : index
    %c0_35 = arith.constant 0 : index
    %93 = vector.load %arg7[%c3, %c0_34, %c0_35] : memref<4x8x9xbf16, #tpu.memory_space<vmem>>, vector<1x8x9xbf16>
    %94 = vector.shape_cast %93 : vector<1x8x9xbf16> to vector<8x9xbf16>
    %cst_36 = arith.constant dense<0.000000e+00> : vector<8x256xf32>
    %95 = tpu.matmul %94, %92, %cst_36 {dimension_numbers = #tpu.dot_dimension_numbers<[1], [0], [0], [1], [0, 0, 1, 1], [], []>} : vector<8x9xbf16>, vector<9x256xbf16>, vector<8x256xf32> -> vector<8x256xf32>
    %96 = arith.addf %77, %95 : vector<8x256xf32>
    %c0_37 = arith.constant 0 : index
    %c0_38 = arith.constant 0 : index
    %97 = vector.load %arg8[%c0_37, %c0_38] : memref<8x1xf32, #tpu.memory_space<vmem>>, vector<8x1xf32>
    %98 = vector.broadcast %97 : vector<8x1xf32> to vector<8x256xf32>
    %99 = arith.addf %96, %98 : vector<8x256xf32>
    %100 = arith.negf %99 : vector<8x256xf32>
    %101 = math.exp %100 : vector<8x256xf32>
    %cst_39 = arith.constant 1.000000e+00 : f32
    %102 = vector.broadcast %cst_39 : f32 to vector<8x256xf32>
    %103 = arith.addf %102, %101 : vector<8x256xf32>
    %104 = arith.divf %102, %103 : vector<8x256xf32>
    %105 = arith.mulf %99, %104 : vector<8x256xf32>
    %106 = arith.truncf %105 : vector<8x256xf32> to vector<8x256xbf16>
    %c0_40 = arith.constant 0 : index
    %c0_41 = arith.constant 0 : index
    %c0_42 = arith.constant 0 : index
    %107 = vector.load %arg10[%c0_40, %c0_41, %c0_42] : memref<1x8x256xbf16, #tpu.memory_space<vmem>>, vector<1x8x256xbf16>
    %108 = vector.shape_cast %107 : vector<1x8x256xbf16> to vector<8x256xbf16>
    %109 = vector.shape_cast %106 : vector<8x256xbf16> to vector<1x8x256xbf16>
    tpu.vector_store %arg10[%c0_40, %c0_41, %c0_42], %109 {strides = array<i32>} : memref<1x8x256xbf16, #tpu.memory_space<vmem>>, vector<1x8x256xbf16>,
    return
  }
  func.func @transform_0(%arg0: i32, %arg1: i32) -> (i32, i32, i32) {
    %c0_i32 = arith.constant 0 : i32
    %c0_i32_0 = arith.constant 0 : i32
    return %arg0, %c0_i32, %arg1 : i32, i32, i32
  }
  func.func @transform_1(%arg0: i32, %arg1: i32) -> (i32, i32, i32) {
    %c0_i32 = arith.constant 0 : i32
    %c0_i32_0 = arith.constant 0 : i32
    return %arg0, %c0_i32, %arg1 : i32, i32, i32
  }
  func.func @transform_2(%arg0: i32, %arg1: i32) -> (i32, i32) {
    %c0_i32 = arith.constant 0 : i32
    %c0_i32_0 = arith.constant 0 : i32
    %c0_i32_1 = arith.constant 0 : i32
    return %c0_i32, %c0_i32_0 : i32, i32
  }
  func.func @transform_3(%arg0: i32, %arg1: i32) -> (i32, i32) {
    %c0_i32 = arith.constant 0 : i32
    %c0_i32_0 = arith.constant 0 : i32
    %c0_i32_1 = arith.constant 0 : i32
    return %c0_i32, %c0_i32_0 : i32, i32
  }
  func.func @transform_4(%arg0: i32, %arg1: i32) -> (i32, i32) {
    %c0_i32 = arith.constant 0 : i32
    %c0_i32_0 = arith.constant 0 : i32
    %c0_i32_1 = arith.constant 0 : i32
    return %c0_i32, %c0_i32_0 : i32, i32
  }
  func.func @transform_5(%arg0: i32, %arg1: i32) -> (i32, i32, i32) {
    %c0_i32 = arith.constant 0 : i32
    %c0_i32_0 = arith.constant 0 : i32
    %c0_i32_1 = arith.constant 0 : i32
    %c0_i32_2 = arith.constant 0 : i32
    return %c0_i32, %c0_i32_0, %c0_i32_1 : i32, i32, i32
  }
  func.func @transform_6(%arg0: i32, %arg1: i32) -> (i32, i32) {
    %c0_i32 = arith.constant 0 : i32
    %c0_i32_0 = arith.constant 0 : i32
    %c0_i32_1 = arith.constant 0 : i32
    return %c0_i32, %c0_i32_0 : i32, i32
  }
  func.func @transform_7(%arg0: i32, %arg1: i32) -> (i32, i32, i32) {
    %c0_i32 = arith.constant 0 : i32
    %c0_i32_0 = arith.constant 0 : i32
    return %arg0, %c0_i32, %arg1 : i32, i32, i32
  }
  func.func @transform_8(%arg0: i32, %arg1: i32) -> (i32, i32, i32) {
    %c0_i32 = arith.constant 0 : i32
    %c0_i32_0 = arith.constant 0 : i32
    return %arg0, %c0_i32, %arg1 : i32, i32, i32
  }
}

module attributes {stable_mosaic.version = 11 : i64} {
  func.func @_sa_combine_kernel(%arg0: i32, %arg1: memref<1x8x16x16xbf16, #tpu.memory_space<vmem>>, %arg2: memref<1x8x16x16xbf16, #tpu.memory_space<vmem>>, %arg3: memref<18xf32, #tpu.memory_space<smem>>, %arg4: memref<1xf32, #tpu.memory_space<smem>>, %arg5: memref<1x8x16x16xf32, #tpu.memory_space<vmem>>, %arg6: memref<18x18xf32, #tpu.memory_space<vmem>>, %arg7: memref<18x18xf32, #tpu.memory_space<vmem>>) attributes {dimension_semantics = [#tpu.dimension_semantics<parallel>], iteration_bounds = array<i64: 2>, scalar_prefetch = 0 : i64, scratch_operands = 2 : i64, tpu.core_type = #tpu.core_type<tc>, window_params = [{transform_indices = @transform_0, window_bounds = array<i64: 1, 8, 16, 16>}, {transform_indices = @transform_1, window_bounds = array<i64: 1, 8, 16, 16>}, {transform_indices = @transform_2, window_bounds = array<i64: 18>}, {transform_indices = @transform_3, window_bounds = array<i64: 1>}, {transform_indices = @transform_4, window_bounds = array<i64: 1, 8, 16, 16>}]} {
    %c0 = arith.constant 0 : index
    %c0_0 = arith.constant 0 : index
    %c0_1 = arith.constant 0 : index
    %c0_2 = arith.constant 0 : index
    %0 = vector.load %arg1[%c0, %c0_0, %c0_1, %c0_2] : memref<1x8x16x16xbf16, #tpu.memory_space<vmem>>, vector<1x8x16x16xbf16>
    %1 = vector.shape_cast %0 : vector<1x8x16x16xbf16> to vector<8x16x16xbf16>
    %2 = arith.extf %1 : vector<8x16x16xbf16> to vector<8x16x16xf32>
    %cst = arith.constant 0.000000e+00 : f32
    %3 = vector.broadcast %cst : f32 to vector<18x18xf32>
    %c0_3 = arith.constant 0 : index
    %c0_4 = arith.constant 0 : index
    %4 = vector.load %arg6[%c0_3, %c0_4] : memref<18x18xf32, #tpu.memory_space<vmem>>, vector<18x18xf32>
    tpu.vector_store %arg6[%c0_3, %c0_4], %3 {strides = array<i32>} : memref<18x18xf32, #tpu.memory_space<vmem>>, vector<18x18xf32>,
    %cst_5 = arith.constant 0.000000e+00 : f32
    %5 = vector.broadcast %cst_5 : f32 to vector<18x18xf32>
    %c0_6 = arith.constant 0 : index
    %c0_7 = arith.constant 0 : index
    %6 = vector.load %arg7[%c0_6, %c0_7] : memref<18x18xf32, #tpu.memory_space<vmem>>, vector<18x18xf32>
    tpu.vector_store %arg7[%c0_6, %c0_7], %5 {strides = array<i32>} : memref<18x18xf32, #tpu.memory_space<vmem>>, vector<18x18xf32>,
    %cst_8 = arith.constant dense<0xFF800000> : vector<16x16xf32>
    %7 = vector.multi_reduction <maximumf>, %2, %cst_8 [0] : vector<8x16x16xf32> to vector<16x16xf32>
    %c1 = arith.constant 1 : index
    %c1_9 = arith.constant 1 : index
    %8 = vector.load %arg6[%c1, %c1_9] : memref<18x18xf32, #tpu.memory_space<vmem>>, vector<16x16xf32>
    tpu.vector_store %arg6[%c1, %c1_9], %7 {strides = array<i32>} : memref<18x18xf32, #tpu.memory_space<vmem>>, vector<16x16xf32>,
    %cst_10 = arith.constant dense<0.000000e+00> : vector<16x16xf32>
    %9 = vector.multi_reduction <add>, %2, %cst_10 [0] : vector<8x16x16xf32> to vector<16x16xf32>
    %cst_11 = arith.constant 1.250000e-01 : f32
    %10 = vector.broadcast %cst_11 : f32 to vector<16x16xf32>
    %11 = arith.mulf %9, %10 : vector<16x16xf32>
    %c1_12 = arith.constant 1 : index
    %c1_13 = arith.constant 1 : index
    %12 = vector.load %arg7[%c1_12, %c1_13] : memref<18x18xf32, #tpu.memory_space<vmem>>, vector<16x16xf32>
    tpu.vector_store %arg7[%c1_12, %c1_13], %11 {strides = array<i32>} : memref<18x18xf32, #tpu.memory_space<vmem>>, vector<16x16xf32>,
    %cst_14 = arith.constant 0.000000e+00 : f32
    %13 = vector.broadcast %cst_14 : f32 to vector<16x16xf32>
    %c0_15 = arith.constant 0 : index
    %14 = memref.load %arg4[%c0_15] : memref<1xf32, #tpu.memory_space<smem>>
    %15 = vector.broadcast %14 : f32 to vector<16x16xf32>
    %16 = arith.addf %13, %15 : vector<16x16xf32>
    %c0_16 = arith.constant 0 : index
    %17 = memref.load %arg3[%c0_16] : memref<18xf32, #tpu.memory_space<smem>>
    %c0_17 = arith.constant 0 : index
    %c0_18 = arith.constant 0 : index
    %18 = vector.load %arg6[%c0_17, %c0_18] : memref<18x18xf32, #tpu.memory_space<vmem>>, vector<16x16xf32>
    %19 = vector.broadcast %17 : f32 to vector<16x16xf32>
    %20 = arith.mulf %19, %18 : vector<16x16xf32>
    %21 = arith.addf %16, %20 : vector<16x16xf32>
    %c9 = arith.constant 9 : index
    %22 = memref.load %arg3[%c9] : memref<18xf32, #tpu.memory_space<smem>>
    %c0_19 = arith.constant 0 : index
    %c0_20 = arith.constant 0 : index
    %23 = vector.load %arg7[%c0_19, %c0_20] : memref<18x18xf32, #tpu.memory_space<vmem>>, vector<16x16xf32>
    %24 = vector.broadcast %22 : f32 to vector<16x16xf32>
    %25 = arith.mulf %24, %23 : vector<16x16xf32>
    %26 = arith.addf %21, %25 : vector<16x16xf32>
    %c1_21 = arith.constant 1 : index
    %27 = memref.load %arg3[%c1_21] : memref<18xf32, #tpu.memory_space<smem>>
    %c0_22 = arith.constant 0 : index
    %c1_23 = arith.constant 1 : index
    %28 = vector.load %arg6[%c0_22, %c1_23] : memref<18x18xf32, #tpu.memory_space<vmem>>, vector<16x16xf32>
    %29 = vector.broadcast %27 : f32 to vector<16x16xf32>
    %30 = arith.mulf %29, %28 : vector<16x16xf32>
    %31 = arith.addf %26, %30 : vector<16x16xf32>
    %c10 = arith.constant 10 : index
    %32 = memref.load %arg3[%c10] : memref<18xf32, #tpu.memory_space<smem>>
    %c0_24 = arith.constant 0 : index
    %c1_25 = arith.constant 1 : index
    %33 = vector.load %arg7[%c0_24, %c1_25] : memref<18x18xf32, #tpu.memory_space<vmem>>, vector<16x16xf32>
    %34 = vector.broadcast %32 : f32 to vector<16x16xf32>
    %35 = arith.mulf %34, %33 : vector<16x16xf32>
    %36 = arith.addf %31, %35 : vector<16x16xf32>
    %c2 = arith.constant 2 : index
    %37 = memref.load %arg3[%c2] : memref<18xf32, #tpu.memory_space<smem>>
    %c0_26 = arith.constant 0 : index
    %c2_27 = arith.constant 2 : index
    %38 = vector.load %arg6[%c0_26, %c2_27] : memref<18x18xf32, #tpu.memory_space<vmem>>, vector<16x16xf32>
    %39 = vector.broadcast %37 : f32 to vector<16x16xf32>
    %40 = arith.mulf %39, %38 : vector<16x16xf32>
    %41 = arith.addf %36, %40 : vector<16x16xf32>
    %c11 = arith.constant 11 : index
    %42 = memref.load %arg3[%c11] : memref<18xf32, #tpu.memory_space<smem>>
    %c0_28 = arith.constant 0 : index
    %c2_29 = arith.constant 2 : index
    %43 = vector.load %arg7[%c0_28, %c2_29] : memref<18x18xf32, #tpu.memory_space<vmem>>, vector<16x16xf32>
    %44 = vector.broadcast %42 : f32 to vector<16x16xf32>
    %45 = arith.mulf %44, %43 : vector<16x16xf32>
    %46 = arith.addf %41, %45 : vector<16x16xf32>
    %c3 = arith.constant 3 : index
    %47 = memref.load %arg3[%c3] : memref<18xf32, #tpu.memory_space<smem>>
    %c1_30 = arith.constant 1 : index
    %c0_31 = arith.constant 0 : index
    %48 = vector.load %arg6[%c1_30, %c0_31] : memref<18x18xf32, #tpu.memory_space<vmem>>, vector<16x16xf32>
    %49 = vector.broadcast %47 : f32 to vector<16x16xf32>
    %50 = arith.mulf %49, %48 : vector<16x16xf32>
    %51 = arith.addf %46, %50 : vector<16x16xf32>
    %c12 = arith.constant 12 : index
    %52 = memref.load %arg3[%c12] : memref<18xf32, #tpu.memory_space<smem>>
    %c1_32 = arith.constant 1 : index
    %c0_33 = arith.constant 0 : index
    %53 = vector.load %arg7[%c1_32, %c0_33] : memref<18x18xf32, #tpu.memory_space<vmem>>, vector<16x16xf32>
    %54 = vector.broadcast %52 : f32 to vector<16x16xf32>
    %55 = arith.mulf %54, %53 : vector<16x16xf32>
    %56 = arith.addf %51, %55 : vector<16x16xf32>
    %c4 = arith.constant 4 : index
    %57 = memref.load %arg3[%c4] : memref<18xf32, #tpu.memory_space<smem>>
    %c1_34 = arith.constant 1 : index
    %c1_35 = arith.constant 1 : index
    %58 = vector.load %arg6[%c1_34, %c1_35] : memref<18x18xf32, #tpu.memory_space<vmem>>, vector<16x16xf32>
    %59 = vector.broadcast %57 : f32 to vector<16x16xf32>
    %60 = arith.mulf %59, %58 : vector<16x16xf32>
    %61 = arith.addf %56, %60 : vector<16x16xf32>
    %c13 = arith.constant 13 : index
    %62 = memref.load %arg3[%c13] : memref<18xf32, #tpu.memory_space<smem>>
    %c1_36 = arith.constant 1 : index
    %c1_37 = arith.constant 1 : index
    %63 = vector.load %arg7[%c1_36, %c1_37] : memref<18x18xf32, #tpu.memory_space<vmem>>, vector<16x16xf32>
    %64 = vector.broadcast %62 : f32 to vector<16x16xf32>
    %65 = arith.mulf %64, %63 : vector<16x16xf32>
    %66 = arith.addf %61, %65 : vector<16x16xf32>
    %c5 = arith.constant 5 : index
    %67 = memref.load %arg3[%c5] : memref<18xf32, #tpu.memory_space<smem>>
    %c1_38 = arith.constant 1 : index
    %c2_39 = arith.constant 2 : index
    %68 = vector.load %arg6[%c1_38, %c2_39] : memref<18x18xf32, #tpu.memory_space<vmem>>, vector<16x16xf32>
    %69 = vector.broadcast %67 : f32 to vector<16x16xf32>
    %70 = arith.mulf %69, %68 : vector<16x16xf32>
    %71 = arith.addf %66, %70 : vector<16x16xf32>
    %c14 = arith.constant 14 : index
    %72 = memref.load %arg3[%c14] : memref<18xf32, #tpu.memory_space<smem>>
    %c1_40 = arith.constant 1 : index
    %c2_41 = arith.constant 2 : index
    %73 = vector.load %arg7[%c1_40, %c2_41] : memref<18x18xf32, #tpu.memory_space<vmem>>, vector<16x16xf32>
    %74 = vector.broadcast %72 : f32 to vector<16x16xf32>
    %75 = arith.mulf %74, %73 : vector<16x16xf32>
    %76 = arith.addf %71, %75 : vector<16x16xf32>
    %c6 = arith.constant 6 : index
    %77 = memref.load %arg3[%c6] : memref<18xf32, #tpu.memory_space<smem>>
    %c2_42 = arith.constant 2 : index
    %c0_43 = arith.constant 0 : index
    %78 = vector.load %arg6[%c2_42, %c0_43] : memref<18x18xf32, #tpu.memory_space<vmem>>, vector<16x16xf32>
    %79 = vector.broadcast %77 : f32 to vector<16x16xf32>
    %80 = arith.mulf %79, %78 : vector<16x16xf32>
    %81 = arith.addf %76, %80 : vector<16x16xf32>
    %c15 = arith.constant 15 : index
    %82 = memref.load %arg3[%c15] : memref<18xf32, #tpu.memory_space<smem>>
    %c2_44 = arith.constant 2 : index
    %c0_45 = arith.constant 0 : index
    %83 = vector.load %arg7[%c2_44, %c0_45] : memref<18x18xf32, #tpu.memory_space<vmem>>, vector<16x16xf32>
    %84 = vector.broadcast %82 : f32 to vector<16x16xf32>
    %85 = arith.mulf %84, %83 : vector<16x16xf32>
    %86 = arith.addf %81, %85 : vector<16x16xf32>
    %c7 = arith.constant 7 : index
    %87 = memref.load %arg3[%c7] : memref<18xf32, #tpu.memory_space<smem>>
    %c2_46 = arith.constant 2 : index
    %c1_47 = arith.constant 1 : index
    %88 = vector.load %arg6[%c2_46, %c1_47] : memref<18x18xf32, #tpu.memory_space<vmem>>, vector<16x16xf32>
    %89 = vector.broadcast %87 : f32 to vector<16x16xf32>
    %90 = arith.mulf %89, %88 : vector<16x16xf32>
    %91 = arith.addf %86, %90 : vector<16x16xf32>
    %c16 = arith.constant 16 : index
    %92 = memref.load %arg3[%c16] : memref<18xf32, #tpu.memory_space<smem>>
    %c2_48 = arith.constant 2 : index
    %c1_49 = arith.constant 1 : index
    %93 = vector.load %arg7[%c2_48, %c1_49] : memref<18x18xf32, #tpu.memory_space<vmem>>, vector<16x16xf32>
    %94 = vector.broadcast %92 : f32 to vector<16x16xf32>
    %95 = arith.mulf %94, %93 : vector<16x16xf32>
    %96 = arith.addf %91, %95 : vector<16x16xf32>
    %c8 = arith.constant 8 : index
    %97 = memref.load %arg3[%c8] : memref<18xf32, #tpu.memory_space<smem>>
    %c2_50 = arith.constant 2 : index
    %c2_51 = arith.constant 2 : index
    %98 = vector.load %arg6[%c2_50, %c2_51] : memref<18x18xf32, #tpu.memory_space<vmem>>, vector<16x16xf32>
    %99 = vector.broadcast %97 : f32 to vector<16x16xf32>
    %100 = arith.mulf %99, %98 : vector<16x16xf32>
    %101 = arith.addf %96, %100 : vector<16x16xf32>
    %c17 = arith.constant 17 : index
    %102 = memref.load %arg3[%c17] : memref<18xf32, #tpu.memory_space<smem>>
    %c2_52 = arith.constant 2 : index
    %c2_53 = arith.constant 2 : index
    %103 = vector.load %arg7[%c2_52, %c2_53] : memref<18x18xf32, #tpu.memory_space<vmem>>, vector<16x16xf32>
    %104 = vector.broadcast %102 : f32 to vector<16x16xf32>
    %105 = arith.mulf %104, %103 : vector<16x16xf32>
    %106 = arith.addf %101, %105 : vector<16x16xf32>
    %107 = arith.negf %106 : vector<16x16xf32>
    %108 = math.exp %107 : vector<16x16xf32>
    %cst_54 = arith.constant 1.000000e+00 : f32
    %109 = vector.broadcast %cst_54 : f32 to vector<16x16xf32>
    %110 = arith.addf %109, %108 : vector<16x16xf32>
    %111 = arith.divf %109, %110 : vector<16x16xf32>
    %c0_55 = arith.constant 0 : index
    %c0_56 = arith.constant 0 : index
    %c0_57 = arith.constant 0 : index
    %c0_58 = arith.constant 0 : index
    %112 = vector.load %arg2[%c0_55, %c0_56, %c0_57, %c0_58] : memref<1x8x16x16xbf16, #tpu.memory_space<vmem>>, vector<1x8x16x16xbf16>
    %113 = vector.shape_cast %112 : vector<1x8x16x16xbf16> to vector<8x16x16xbf16>
    %114 = arith.extf %113 : vector<8x16x16xbf16> to vector<8x16x16xf32>
    %cst_59 = arith.constant 1.000000e+00 : f32
    %115 = vector.broadcast %cst_59 : f32 to vector<8x16x16xf32>
    %116 = arith.addf %115, %114 : vector<8x16x16xf32>
    %117 = vector.shape_cast %111 : vector<16x16xf32> to vector<1x16x16xf32>
    %118 = vector.broadcast %117 : vector<1x16x16xf32> to vector<8x16x16xf32>
    %119 = arith.addf %116, %118 : vector<8x16x16xf32>
    %120 = arith.mulf %2, %119 : vector<8x16x16xf32>
    %c0_60 = arith.constant 0 : index
    %c0_61 = arith.constant 0 : index
    %c0_62 = arith.constant 0 : index
    %c0_63 = arith.constant 0 : index
    %121 = vector.load %arg5[%c0_60, %c0_61, %c0_62, %c0_63] : memref<1x8x16x16xf32, #tpu.memory_space<vmem>>, vector<1x8x16x16xf32>
    %122 = vector.shape_cast %121 : vector<1x8x16x16xf32> to vector<8x16x16xf32>
    %123 = vector.shape_cast %120 : vector<8x16x16xf32> to vector<1x8x16x16xf32>
    tpu.vector_store %arg5[%c0_60, %c0_61, %c0_62, %c0_63], %123 {strides = array<i32>} : memref<1x8x16x16xf32, #tpu.memory_space<vmem>>, vector<1x8x16x16xf32>,
    return
  }
  func.func @transform_0(%arg0: i32) -> (i32, i32, i32, i32) {
    %c0_i32 = arith.constant 0 : i32
    %c0_i32_0 = arith.constant 0 : i32
    %c0_i32_1 = arith.constant 0 : i32
    %c0_i32_2 = arith.constant 0 : i32
    return %arg0, %c0_i32, %c0_i32_0, %c0_i32_1 : i32, i32, i32, i32
  }
  func.func @transform_1(%arg0: i32) -> (i32, i32, i32, i32) {
    %c0_i32 = arith.constant 0 : i32
    %c0_i32_0 = arith.constant 0 : i32
    %c0_i32_1 = arith.constant 0 : i32
    %c0_i32_2 = arith.constant 0 : i32
    return %arg0, %c0_i32, %c0_i32_0, %c0_i32_1 : i32, i32, i32, i32
  }
  func.func @transform_2(%arg0: i32) -> i32 {
    %c0_i32 = arith.constant 0 : i32
    %c0_i32_0 = arith.constant 0 : i32
    return %c0_i32 : i32
  }
  func.func @transform_3(%arg0: i32) -> i32 {
    %c0_i32 = arith.constant 0 : i32
    %c0_i32_0 = arith.constant 0 : i32
    return %c0_i32 : i32
  }
  func.func @transform_4(%arg0: i32) -> (i32, i32, i32, i32) {
    %c0_i32 = arith.constant 0 : i32
    %c0_i32_0 = arith.constant 0 : i32
    %c0_i32_1 = arith.constant 0 : i32
    %c0_i32_2 = arith.constant 0 : i32
    return %arg0, %c0_i32, %c0_i32_0, %c0_i32_1 : i32, i32, i32, i32
  }
}

</mosaic_0001>

<llo_original>
// kernel: rfsw_forward.3
$region0: #{rfsw_forward.3}
  #allocation0 [shape = 'u32[]', space=smem, size = 0x4, offset = 0x4, fixed_abs, tag = 'smem constant byte address 0x4 - core index']
  #allocation1 [shape = 'u32[144,128]{1,0:T(1,128)}', space=vmem, size = 0x12000, scoped, tag = 'internal scratch']
  #allocation2 [shape = 'f32[18,18]{1,0:T(8,128)}', space=vmem, size = 0x3000, scoped, tag = 'scratch operand']
  #allocation3 [shape = 'f32[18,18]{1,0:T(8,128)}', space=vmem, size = 0x3000, scoped, tag = 'scratch operand']
  #allocation4 [shape = 'f32[1]{0:T(128)S(6)}', space=smem, size = 0x200, scoped, tag = 'scoped memory for rfsw_forward.3']
  %s0 = inlined_call_operand.vmem [shape: bf16[2,8,16,16], index: 0, kind: input, shape index: {}]
  %s1 = inlined_call_operand.vmem [shape: bf16[2,8,16,16], index: 1, kind: input, shape index: {}]
  %s2 = inlined_call_operand.vmem [shape: f32[18], index: 2, kind: input, shape index: {}]
  %s3 = inlined_call_operand.<no memory space> [shape: f32[1], index: 3, kind: input, shape index: {}]
  %s4 = inlined_call_operand.hbm [shape: f32[2,8,16,16], index: 4, kind: output, shape index: {}]
  %s5 = sld [smem:[#allocation0]]
  $region53: #{rfsw_forward.3} parent=0
    _
  %s7 = ssub.s32 1, %s5
  %s8 = scalar_select 0, %s7, %s5
  %9 = sst [smem:[#allocation4]] %s3
  $region1: #{rfsw_forward.3} parent=0
    #allocation5 [shape = 'u8[512]{0}', space=smem, size = 0x200, scoped, tag = 'input window, operand 2, single buffered']
    #allocation6 [shape = 's32[2]{0}', space=sflag, size = 0x8, scoped, tag = 'scoped memory for rfsw_forward.3']
    #allocation7 [shape = 's32[2]{0}', space=sflag, size = 0x8, scoped, tag = 'scoped memory for rfsw_forward.3']
    #allocation8 [shape = 'u8[131072]{0}', space=vmem, size = 0x20000, scoped, tag = 'output window, operand 0']
    %10 = vsyncpa [#allocation7], 0
    %11 = vsyncpa [#allocation6], 0
    %s12 = scalar_lea.sflag [#allocation6], 1
    %13 = vsyncpa %s12, 0
    loop: start=0, step=1, limit=4
    $region2: #{rfsw_forward.3} parent=1 // loop_pre_header
      _
    $region3: #{rfsw_forward.3} parent=1 // loop_header
      %s15 = sphi 0, %s19
      %p16 = scmp.ge.s32.totalorder %s15, 4
      %s25 = sphi 0, %s27
      %s28 = sphi 0, %s25
      %s29 = sphi 0, %s28
      %s45 = sphi 0, %s29
      %s51 = sphi 0, %s53
      %s54 = sphi 0, %s51
      %s55 = sphi 0, %s54
      %s71 = sphi 0, %s55
      %s75 = sphi 0, %s75
      %s77 = sphi 0, %s75
      %s78 = sphi 0, %s77
      %s92 = sphi 0, %s78
      %s96 = sphi 0, %s96
      %s98 = sphi 0, %s96
      %s99 = sphi 0, %s98
      %s113 = sphi 0, %s99
      %s119 = sphi 0, %s121
      %s122 = sphi 0, %s119
      %s123 = sphi 0, %s122
      %s139 = sphi 0, %s123
    $region4: #{rfsw_forward.3} parent=1 // loop_header_branch
      %18 = sbr.rel (%p16) target = $region8
    $region5: #{rfsw_forward.3} parent=1 // loop_body
      %s20 = ssub.s32 %s15, 1
      %s21 = ssub.s32 %s15, 2
      %s22 = sadd.s32 %s15, 1
      %s23 = ssub.s32 %s15, %s22
      %p24 = scmp.eq.s32.totalorder %s23, 0
      %s26 = sadd.s32 %s25, 1
      %s27 = scalar_select %p24, %s25, %s26
      %p30 = pneg %p24
      %p31 = scmp.eq.s32.totalorder %s15, 1
      %p32 = por %p30, %p31
      %p33 = scmp.ne.s32.totalorder %s25, %s28
      %p34 = scmp.eq.s32.totalorder %s15, 0
      %p35 = por %p33, %p34
      %p36 = scmp.ne.s32.totalorder %s25, %s28
      %p37 = scmp.eq.s32.totalorder %s20, 1
      %p38 = por %p36, %p37
      %p39 = scmp.ne.s32.totalorder %s28, %s29
      %p40 = scmp.eq.s32.totalorder %s20, 0
      %p41 = por %p39, %p40
      %p42 = scmp.ne.s32.totalorder %s28, %s29
      %p43 = scmp.eq.s32.totalorder %s21, 1
      %p44 = por %p42, %p43
      %p46 = scmp.ne.s32.totalorder %s29, %s45
      %p47 = scmp.eq.s32.totalorder %s21, 0
      %p48 = por %p46, %p47
      %s49 = ssub.s32 %s15, %s22
      %p50 = scmp.eq.s32.totalorder %s49, 0
      %s52 = sadd.s32 %s51, 1
      %s53 = scalar_select %p50, %s51, %s52
      %p56 = pneg %p50
      %p57 = scmp.eq.s32.totalorder %s15, 1
      %p58 = por %p56, %p57
      %p59 = scmp.ne.s32.totalorder %s51, %s54
      %p60 = scmp.eq.s32.totalorder %s15, 0
      %p61 = por %p59, %p60
      %p62 = scmp.ne.s32.totalorder %s51, %s54
      %p63 = scmp.eq.s32.totalorder %s20, 1
      %p64 = por %p62, %p63
      %p65 = scmp.ne.s32.totalorder %s54, %s55
      %p66 = scmp.eq.s32.totalorder %s20, 0
      %p67 = por %p65, %p66
      %p68 = scmp.ne.s32.totalorder %s54, %s55
      %p69 = scmp.eq.s32.totalorder %s21, 1
      %p70 = por %p68, %p69
      %p72 = scmp.ne.s32.totalorder %s55, %s71
      %p73 = scmp.eq.s32.totalorder %s21, 0
      %p74 = por %p72, %p73
      %s76 = sadd.s32 %s75, 1
      %p79 = scmp.eq.s32.totalorder %s15, 1
      %p80 = scmp.ne.s32.totalorder %s75, %s77
      %p81 = scmp.eq.s32.totalorder %s15, 0
      %p82 = por %p80, %p81
      %p83 = scmp.ne.s32.totalorder %s75, %s77
      %p84 = scmp.eq.s32.totalorder %s20, 1
      %p85 = por %p83, %p84
      %p86 = scmp.ne.s32.totalorder %s77, %s78
      %p87 = scmp.eq.s32.totalorder %s20, 0
      %p88 = por %p86, %p87
      %p89 = scmp.ne.s32.totalorder %s77, %s78
      %p90 = scmp.eq.s32.totalorder %s21, 1
      %p91 = por %p89, %p90
      %p93 = scmp.ne.s32.totalorder %s78, %s92
      %p94 = scmp.eq.s32.totalorder %s21, 0
      %p95 = por %p93, %p94
      %s97 = sadd.s32 %s96, 1
      %p100 = scmp.eq.s32.totalorder %s15, 1
      %p101 = scmp.ne.s32.totalorder %s96, %s98
      %p102 = scmp.eq.s32.totalorder %s15, 0
      %p103 = por %p101, %p102
      %p104 = scmp.ne.s32.totalorder %s96, %s98
      %p105 = scmp.eq.s32.totalorder %s20, 1
      %p106 = por %p104, %p105
      %p107 = scmp.ne.s32.totalorder %s98, %s99
      %p108 = scmp.eq.s32.totalorder %s20, 0
      %p109 = por %p107, %p108
      %p110 = scmp.ne.s32.totalorder %s98, %s99
      %p111 = scmp.eq.s32.totalorder %s21, 1
      %p112 = por %p110, %p111
      %p114 = scmp.ne.s32.totalorder %s99, %s113
      %p115 = scmp.eq.s32.totalorder %s21, 0
      %p116 = por %p114, %p115
      %s117 = ssub.s32 %s15, %s22
      %p118 = scmp.eq.s32.totalorder %s117, 0
      %s120 = sadd.s32 %s119, 1
      %s121 = scalar_select %p118, %s119, %s120
      %p124 = pneg %p118
      %p125 = scmp.eq.s32.totalorder %s15, 1
      %p126 = por %p124, %p125
      %p127 = scmp.ne.s32.totalorder %s119, %s122
      %p128 = scmp.eq.s32.totalorder %s15, 0
      %p129 = por %p127, %p128
      %p130 = scmp.ne.s32.totalorder %s119, %s122
      %p131 = scmp.eq.s32.totalorder %s20, 1
      %p132 = por %p130, %p131
      %p133 = scmp.ne.s32.totalorder %s122, %s123
      %p134 = scmp.eq.s32.totalorder %s20, 0
      %p135 = por %p133, %p134
      %p136 = scmp.ne.s32.totalorder %s122, %s123
      %p137 = scmp.eq.s32.totalorder %s21, 1
      %p138 = por %p136, %p137
      %p140 = scmp.ne.s32.totalorder %s123, %s139
      %p141 = scmp.eq.s32.totalorder %s21, 0
      %p142 = por %p140, %p141
      %p143 = scmp.le.s32.totalorder 1, %s15
      %p144 = scmp.lt.s32.totalorder %s15, 3
      %p145 = pnand %p143, %p144
      %p146 = pneg %p145
      // Predicated region
      $region9: #{rfsw_forward.3} parent=5 // pred_check
        _
      $region10: #{rfsw_forward.3} parent=5 // pred_check_branch
        %148 = sbr.rel (%p145) target = $region12
      $region11: #{rfsw_forward.3} parent=5 // pred_region
        %s149 = ssub.s32 %s15, 1
        // Predicated region
        $region13: #{rfsw_forward.3} parent=11 // pred_check
          %p150 = pneg %p88
        $region14: #{rfsw_forward.3} parent=11 // pred_check_branch
          %152 = sbr.rel (%p150) target = $region16
        $region15: #{rfsw_forward.3} parent=11 // pred_region
          %s154 = ssub.s32 16, 16
          %155 = vsyncadd [#allocation7], %s154
          %s157 = sshll.u32 %s2, 4
          %s158 = int_to_ptr.vmem [resolvable:$true] %s157
          %160 = dma.vmem_to_smem %s158, 16, [#allocation5], [#allocation7]
        $region16: #{rfsw_forward.3} parent=11 // pred_fallthru
          _
        // Predicated region
        $region17: #{rfsw_forward.3} parent=11 // pred_check
          %p161 = pneg %p109
        $region18: #{rfsw_forward.3} parent=11 // pred_check_branch
          %163 = sbr.rel (%p161) target = $region20
        $region19: #{rfsw_forward.3} parent=11 // pred_region
          _
        $region20: #{rfsw_forward.3} parent=11 // pred_fallthru
          _
      $region12: #{rfsw_forward.3} parent=5 // pred_fallthru
        _
      %p164 = scmp.lt.s32.totalorder %s15, 2
      // Predicated region
      $region21: #{rfsw_forward.3} parent=5 // pred_check
        %p165 = pneg %p164
      $region22: #{rfsw_forward.3} parent=5 // pred_check_branch
        %167 = sbr.rel (%p165) target = $region24
      $region23: #{rfsw_forward.3} parent=5 // pred_region
        // Predicated region
        $region25: #{rfsw_forward.3} parent=23 // pred_check
          %p168 = pneg %p35
        $region26: #{rfsw_forward.3} parent=23 // pred_check_branch
          %170 = sbr.rel (%p168) target = $region28
        $region27: #{rfsw_forward.3} parent=23 // pred_region
          %p171 = scmp.lt.s32.totalorder %s15, 1
          %s172 = scalar_select %p171, %s15, 1
          %s173 = smul.addr %s172, 16
          %s174 = smul.addr %s173, 4
          %s175 = scalar_lea.vmem %s0, %s174
        $region28: #{rfsw_forward.3} parent=23 // pred_fallthru
          _
        // Predicated region
        $region29: #{rfsw_forward.3} parent=23 // pred_check
          %p176 = pneg %p61
        $region30: #{rfsw_forward.3} parent=23 // pred_check_branch
          %178 = sbr.rel (%p176) target = $region32
        $region31: #{rfsw_forward.3} parent=23 // pred_region
          %p179 = scmp.lt.s32.totalorder %s15, 1
          %s180 = scalar_select %p179, %s15, 1
          %s181 = smul.addr %s180, 16
          %s182 = smul.addr %s181, 4
          %s183 = scalar_lea.vmem %s1, %s182
        $region32: #{rfsw_forward.3} parent=23 // pred_fallthru
          _
      $region24: #{rfsw_forward.3} parent=5 // pred_fallthru
        _
      %p184 = scmp.le.s32.totalorder 1, %s15
      %p185 = scmp.lt.s32.totalorder %s15, 3
      %p186 = pnand %p184, %p185
      %p187 = pneg %p186
      // Predicated region
      $region33: #{rfsw_forward.3} parent=5 // pred_check
        _
      $region34: #{rfsw_forward.3} parent=5 // pred_check_branch
        %189 = sbr.rel (%p186) target = $region36
      $region35: #{rfsw_forward.3} parent=5 // pred_region
        %s190 = ssub.s32 %s15, 1
        // Predicated region
        $region37: #{rfsw_forward.3} parent=35 // pred_check
          %p191 = pneg %p88
        $region38: #{rfsw_forward.3} parent=35 // pred_check_branch
          %193 = sbr.rel (%p191) target = $region40
        $region39: #{rfsw_forward.3} parent=35 // pred_region
          %194 = dma.done [#allocation7], 16
        $region40: #{rfsw_forward.3} parent=35 // pred_fallthru
          _
        %195 = sfence
        %p196 = scmp.lt.s32.totalorder %s20, 1
        %s197 = scalar_select %p196, %s20, 1
        %s198 = smul.addr %s197, 16
        %s199 = smul.addr %s198, 4
        %s200 = scalar_lea.vmem %s0, %s199
        %p201 = pneg %p41
        %p202 = pneg %p38
        %p203 = scmp.lt.s32.totalorder %s20, 1
        %s204 = scalar_select %p203, %s20, 1
        %s205 = smul.addr %s204, 16
        %s206 = smul.addr %s205, 4
        %s207 = scalar_lea.vmem %s1, %s206
        %p208 = pneg %p67
        %p209 = pneg %p64
        %p210 = pneg %p88
        %p211 = pneg %p85
        %p212 = pneg %p109
        %p213 = pneg %p106
        %p214 = pneg %p135
        %p215 = pneg %p132
        %s216 = sand.u32 %s122, 1
        %s217 = scalar_lea.sflag [#allocation6], %s216
        %s218 = sand.u32 %s122, 1
        %s219 = smul.addr %s218, 128
        %s220 = scalar_lea.vmem [#allocation8], %s219
        %p221 = scmp.lt.s32.totalorder %s20, 1
        %s222 = scalar_select %p221, %s20, 1
        %s223 = smul.addr %s222, 16
        %s224 = smul.addr %s223, 4
        %s225 = scalar_lea.vmem %s0, %s224
        %p226 = scmp.lt.s32.totalorder %s20, 1
        %s227 = scalar_select %p226, %s20, 1
        %s228 = smul.addr %s227, 16
        %s229 = smul.addr %s228, 4
        %s230 = scalar_lea.vmem %s1, %s229
        %v231 = vld [vmem:[%s225] sm:$0xf]
        %v232 = vld [vmem:[%s225 + $0x4] sm:$0xf]
        %v233 = vld [vmem:[%s225 + $0x8] sm:$0xf]
        %v234 = vld [vmem:[%s225 + $0xc] sm:$0xf]
        %v235 = vld [vmem:[%s225 + $0x10] sm:$0xf]
        %v236 = vld [vmem:[%s225 + $0x14] sm:$0xf]
        %v237 = vld [vmem:[%s225 + $0x18] sm:$0xf]
        %v238 = vld [vmem:[%s225 + $0x1c] sm:$0xf]
        %v239 = vld [vmem:[%s225 + $0x20] sm:$0xf]
        %v240 = vld [vmem:[%s225 + $0x24] sm:$0xf]
        %v241 = vld [vmem:[%s225 + $0x28] sm:$0xf]
        %v242 = vld [vmem:[%s225 + $0x2c] sm:$0xf]
        %v243 = vld [vmem:[%s225 + $0x30] sm:$0xf]
        %v244 = vld [vmem:[%s225 + $0x34] sm:$0xf]
        %v245 = vld [vmem:[%s225 + $0x38] sm:$0xf]
        %v246 = vld [vmem:[%s225 + $0x3c] sm:$0xf]
        %v247 = vunpack.c.l.bf16 %v231
        %v248 = vunpack.c.l.bf16 %v232
        %v249 = vunpack.c.l.bf16 %v233
        %v250 = vunpack.c.l.bf16 %v234
        %v251 = vunpack.c.l.bf16 %v235
        %v252 = vunpack.c.l.bf16 %v236
        %v253 = vunpack.c.l.bf16 %v237
        %v254 = vunpack.c.l.bf16 %v238
        %v255 = vunpack.c.l.bf16 %v239
        %v256 = vunpack.c.l.bf16 %v240
        %v257 = vunpack.c.l.bf16 %v241
        %v258 = vunpack.c.l.bf16 %v242
        %v259 = vunpack.c.l.bf16 %v243
        %v260 = vunpack.c.l.bf16 %v244
        %v261 = vunpack.c.l.bf16 %v245
        %v262 = vunpack.c.l.bf16 %v246
        %vm263 = vcmask 146432
        %264 = vst.msk [vmem:[#allocation2] sm:$0xff] %vm263, 0.0
        %265 = vst.msk [vmem:[#allocation2 + $0x8] sm:$0xff] %vm263, 0.0
        %vm266 = vcmask 140288
        %267 = vst.msk [vmem:[#allocation2 + $0x10] sm:$0x3] %vm266, 0.0
        %268 = vst.msk [vmem:[#allocation3] sm:$0xff] %vm263, 0.0
        %269 = vst.msk [vmem:[#allocation3 + $0x8] sm:$0xff] %vm263, 0.0
        %270 = vst.msk [vmem:[#allocation3 + $0x10] sm:$0x3] %vm266, 0.0
        %vm271 = vcmask 130048
        %v272 = vsel %vm271, %v247, -inf
        %v273 = vsel %vm271, %v249, -inf
        %v274 = vsel %vm271, %v251, -inf
        %v275 = vmax.f32 %v272, %v274
        %v276 = vsel %vm271, %v253, -inf
        %v277 = vmax.f32 %v273, %v276
        %v278 = vsel %vm271, %v255, -inf
        %v279 = vmax.f32 %v275, %v278
        %v280 = vsel %vm271, %v257, -inf
        %v281 = vmax.f32 %v277, %v280
        %v282 = vsel %vm271, %v259, -inf
        %v283 = vmax.f32 %v279, %v282
        %v284 = vsel %vm271, %v261, -inf
        %v285 = vmax.f32 %v281, %v284
        %v286 = vmax.f32 %v283, %v285
        %v287 = vsel %vm271, %v248, -inf
        %v288 = vsel %vm271, %v250, -inf
        %v289 = vsel %vm271, %v252, -inf
        %v290 = vmax.f32 %v287, %v289
        %v291 = vsel %vm271, %v254, -inf
        %v292 = vmax.f32 %v288, %v291
        %v293 = vsel %vm271, %v256, -inf
        %v294 = vmax.f32 %v290, %v293
        %v295 = vsel %vm271, %v258, -inf
        %v296 = vmax.f32 %v292, %v295
        %v297 = vsel %vm271, %v260, -inf
        %v298 = vmax.f32 %v294, %v297
        %v299 = vsel %vm271, %v262, -inf
        %v300 = vmax.f32 %v296, %v299
        %v301 = vmax.f32 %v298, %v300
        %304 = vrot.lane.b32.xlu0 %v286, 1
        %v305 = vpop.permute.xlu0 %304
        %306 = vrot.lane.b32.xlu0 %v301, 1
        %v307 = vpop.permute.xlu0 %306
        %vm310 = vcmask 138248
        %311 = vst.msk [vmem:[#allocation2 + $0x1] sm:$0xff] %vm310, %v305
        %312 = vst.msk [vmem:[#allocation2 + $0x9] sm:$0xff] %vm310, %v307
        %v313 = vsel %vm271, %v247, 0.0
        %v314 = vsel %vm271, %v249, 0.0
        %v315 = vadd.f32 %v313, %v314
        %v316 = vsel %vm271, %v251, 0.0
        %v317 = vadd.f32 %v315, %v316
        %v318 = vsel %vm271, %v253, 0.0
        %v319 = vadd.f32 %v317, %v318
        %v320 = vsel %vm271, %v255, 0.0
        %v321 = vadd.f32 %v319, %v320
        %v322 = vsel %vm271, %v257, 0.0
        %v323 = vadd.f32 %v321, %v322
        %v324 = vsel %vm271, %v259, 0.0
        %v325 = vadd.f32 %v323, %v324
        %v326 = vsel %vm271, %v261, 0.0
        %v327 = vadd.f32 %v325, %v326
        %v328 = vsel %vm271, %v248, 0.0
        %v329 = vsel %vm271, %v250, 0.0
        %v330 = vadd.f32 %v328, %v329
        %v331 = vsel %vm271, %v252, 0.0
        %v332 = vadd.f32 %v330, %v331
        %v333 = vsel %vm271, %v254, 0.0
        %v334 = vadd.f32 %v332, %v333
        %v335 = vsel %vm271, %v256, 0.0
        %v336 = vadd.f32 %v334, %v335
        %v337 = vsel %vm271, %v258, 0.0
        %v338 = vadd.f32 %v336, %v337
        %v339 = vsel %vm271, %v260, 0.0
        %v340 = vadd.f32 %v338, %v339
        %v341 = vsel %vm271, %v262, 0.0
        %v342 = vadd.f32 %v340, %v341
        %v343 = vmul.f32 %v327, 0.125
        %v344 = vmul.f32 %v342, 0.125
        %347 = vrot.lane.b32.xlu0 %v343, 1
        %v348 = vpop.permute.xlu0 %347
        %349 = vrot.lane.b32.xlu0 %v344, 1
        %v350 = vpop.permute.xlu0 %349
        %353 = vst.msk [vmem:[#allocation3 + $0x1] sm:$0xff] %vm310, %v348
        %354 = vst.msk [vmem:[#allocation3 + $0x9] sm:$0xff] %vm310, %v350
        %s355 = sld [smem:[#allocation4]]
        %v356 = vstv %s355
        %v357 = vadd.f32 %v356, 0.0
        %s358 = sld [smem:[#allocation5]]
        %v359 = vld [vmem:[#allocation2] sm:$0xff]
        %v360 = vld [vmem:[#allocation2 + $0x8] sm:$0xff]
        %v361 = vstv %s358
        %v362 = vmul.f32 %v361, %v359
        %v363 = vmul.f32 %v361, %v360
        %v364 = vadd.f32 %v357, %v362
        %v365 = vadd.f32 %v357, %v363
        %s366 = sld [smem:[#allocation5 + $0x9]]
        %v367 = vld [vmem:[#allocation3] sm:$0xff]
        %v368 = vld [vmem:[#allocation3 + $0x8] sm:$0xff]
        %v369 = vstv %s366
        %v370 = vmul.f32 %v369, %v367
        %v371 = vmul.f32 %v369, %v368
        %v372 = vadd.f32 %v364, %v370
        %v373 = vadd.f32 %v365, %v371
        %s374 = sld [smem:[#allocation5 + $0x1]]
        %v375 = vstv %s374
        %v376 = vmul.f32 %v375, %v359
        %v377 = vmul.f32 %v375, %v360
        %380 = vrot.lane.b32.xlu0 %v376, 127
        %v381 = vpop.permute.xlu0 %380
        %382 = vrot.lane.b32.xlu0 %v377, 127
        %v383 = vpop.permute.xlu0 %382
        %v386 = vadd.f32 %v372, %v381
        %v387 = vadd.f32 %v373, %v383
        %s388 = sld [smem:[#allocation5 + $0xa]]
        %v389 = vstv %s388
        %v390 = vmul.f32 %v389, %v367
        %v391 = vmul.f32 %v389, %v368
        %394 = vrot.lane.b32.xlu0 %v390, 127
        %v395 = vpop.permute.xlu0 %394
        %396 = vrot.lane.b32.xlu0 %v391, 127
        %v397 = vpop.permute.xlu0 %396
        %v400 = vadd.f32 %v386, %v395
        %v401 = vadd.f32 %v387, %v397
        %s402 = sld [smem:[#allocation5 + $0x2]]
        %v403 = vstv %s402
        %v404 = vmul.f32 %v403, %v359
        %v405 = vmul.f32 %v403, %v360
        %408 = vrot.lane.b32.xlu0 %v404, 126
        %v409 = vpop.permute.xlu0 %408
        %410 = vrot.lane.b32.xlu0 %v405, 126
        %v411 = vpop.permute.xlu0 %410
        %v414 = vadd.f32 %v400, %v409
        %v415 = vadd.f32 %v401, %v411
        %s416 = sld [smem:[#allocation5 + $0xb]]
        %v417 = vstv %s416
        %v418 = vmul.f32 %v417, %v367
        %v419 = vmul.f32 %v417, %v368
        %422 = vrot.lane.b32.xlu0 %v418, 126
        %v423 = vpop.permute.xlu0 %422
        %424 = vrot.lane.b32.xlu0 %v419, 126
        %v425 = vpop.permute.xlu0 %424
        %v428 = vadd.f32 %v414, %v423
        %v429 = vadd.f32 %v415, %v425
        %s430 = sld [smem:[#allocation5 + $0x3]]
        %v431 = vld [vmem:[#allocation2 + $0x1] sm:$0xff]
        %v432 = vld [vmem:[#allocation2 + $0x9] sm:$0xff]
        %v433 = vstv %s430
        %v434 = vmul.f32 %v433, %v431
        %v435 = vmul.f32 %v433, %v432
        %v436 = vadd.f32 %v428, %v434
        %v437 = vadd.f32 %v429, %v435
        %s438 = sld [smem:[#allocation5 + $0xc]]
        %v439 = vld [vmem:[#allocation3 + $0x1] sm:$0xff]
        %v440 = vld [vmem:[#allocation3 + $0x9] sm:$0xff]
        %v441 = vstv %s438
        %v442 = vmul.f32 %v441, %v439
        %v443 = vmul.f32 %v441, %v440
        %v444 = vadd.f32 %v436, %v442
        %v445 = vadd.f32 %v437, %v443
        %s446 = sld [smem:[#allocation5 + $0x4]]
        %v447 = vstv %s446
        %v448 = vmul.f32 %v447, %v431
        %v449 = vmul.f32 %v447, %v432
        %452 = vrot.lane.b32.xlu0 %v448, 127
        %v453 = vpop.permute.xlu0 %452
        %454 = vrot.lane.b32.xlu0 %v449, 127
        %v455 = vpop.permute.xlu0 %454
        %v458 = vadd.f32 %v444, %v453
        %v459 = vadd.f32 %v445, %v455
        %s460 = sld [smem:[#allocation5 + $0xd]]
        %v461 = vstv %s460
        %v462 = vmul.f32 %v461, %v439
        %v463 = vmul.f32 %v461, %v440
        %466 = vrot.lane.b32.xlu0 %v462, 127
        %v467 = vpop.permute.xlu0 %466
        %468 = vrot.lane.b32.xlu0 %v463, 127
        %v469 = vpop.permute.xlu0 %468
        %v472 = vadd.f32 %v458, %v467
        %v473 = vadd.f32 %v459, %v469
        %s474 = sld [smem:[#allocation5 + $0x5]]
        %v475 = vstv %s474
        %v476 = vmul.f32 %v475, %v431
        %v477 = vmul.f32 %v475, %v432
        %480 = vrot.lane.b32.xlu0 %v476, 126
        %v481 = vpop.permute.xlu0 %480
        %482 = vrot.lane.b32.xlu0 %v477, 126
        %v483 = vpop.permute.xlu0 %482
        %v486 = vadd.f32 %v472, %v481
        %v487 = vadd.f32 %v473, %v483
        %s488 = sld [smem:[#allocation5 + $0xe]]
        %v489 = vstv %s488
        %v490 = vmul.f32 %v489, %v439
        %v491 = vmul.f32 %v489, %v440
        %494 = vrot.lane.b32.xlu0 %v490, 126
        %v495 = vpop.permute.xlu0 %494
        %496 = vrot.lane.b32.xlu0 %v491, 126
        %v497 = vpop.permute.xlu0 %496
        %v500 = vadd.f32 %v486, %v495
        %v501 = vadd.f32 %v487, %v497
        %s502 = sld [smem:[#allocation5 + $0x6]]
        %v503 = vld [vmem:[#allocation2 + $0x2] sm:$0xff]
        %v504 = vld [vmem:[#allocation2 + $0xa] sm:$0xff]
        %v505 = vstv %s502
        %v506 = vmul.f32 %v505, %v503
        %v507 = vmul.f32 %v505, %v504
        %v508 = vadd.f32 %v500, %v506
        %v509 = vadd.f32 %v501, %v507
        %s510 = sld [smem:[#allocation5 + $0xf]]
        %v511 = vld [vmem:[#allocation3 + $0x2] sm:$0xff]
        %v512 = vld [vmem:[#allocation3 + $0xa] sm:$0xff]
        %v513 = vstv %s510
        %v514 = vmul.f32 %v513, %v511
        %v515 = vmul.f32 %v513, %v512
        %v516 = vadd.f32 %v508, %v514
        %v517 = vadd.f32 %v509, %v515
        %s518 = sld [smem:[#allocation5 + $0x7]]
        %v519 = vstv %s518
        %v520 = vmul.f32 %v519, %v503
        %v521 = vmul.f32 %v519, %v504
        %524 = vrot.lane.b32.xlu0 %v520, 127
        %v525 = vpop.permute.xlu0 %524
        %526 = vrot.lane.b32.xlu0 %v521, 127
        %v527 = vpop.permute.xlu0 %526
        %v530 = vadd.f32 %v516, %v525
        %v531 = vadd.f32 %v517, %v527
        %s532 = sld [smem:[#allocation5 + $0x10]]
        %v533 = vstv %s532
        %v534 = vmul.f32 %v533, %v511
        %v535 = vmul.f32 %v533, %v512
        %538 = vrot.lane.b32.xlu0 %v534, 127
        %v539 = vpop.permute.xlu0 %538
        %540 = vrot.lane.b32.xlu0 %v535, 127
        %v541 = vpop.permute.xlu0 %540
        %v544 = vadd.f32 %v530, %v539
        %v545 = vadd.f32 %v531, %v541
        %s546 = sld [smem:[#allocation5 + $0x8]]
        %v547 = vstv %s546
        %v548 = vmul.f32 %v547, %v503
        %v549 = vmul.f32 %v547, %v504
        %552 = vrot.lane.b32.xlu0 %v548, 126
        %v553 = vpop.permute.xlu0 %552
        %554 = vrot.lane.b32.xlu0 %v549, 126
        %v555 = vpop.permute.xlu0 %554
        %v558 = vadd.f32 %v544, %v553
        %v559 = vadd.f32 %v545, %v555
        %s560 = sld [smem:[#allocation5 + $0x11]]
        %v561 = vstv %s560
        %v562 = vmul.f32 %v561, %v511
        %v563 = vmul.f32 %v561, %v512
        %566 = vrot.lane.b32.xlu0 %v562, 126
        %v567 = vpop.permute.xlu0 %566
        %568 = vrot.lane.b32.xlu0 %v563, 126
        %v569 = vpop.permute.xlu0 %568
        %v572 = vadd.f32 %v558, %v567
        %v573 = vadd.f32 %v559, %v569
        %v574 = vxor.u32 %v572, 2147483648
        %v575 = vxor.u32 %v573, 2147483648
        %v576 = vmul.f32 %v574, 1.442695
        %v577 = vpow.pop %v576
        %v578 = vmul.f32 %v575, 1.442695
        %v579 = vpow.pop %v578
        %v580 = vadd.f32 %v577, 1.0
        %v581 = vadd.f32 %v579, 1.0
        %v582 = vrcp.pop %v580
        %v583 = vmul.f32 1.0, %v582
        %v584 = vrcp.pop %v581
        %v585 = vmul.f32 1.0, %v584
        %v586 = vld [vmem:[%s230] sm:$0xf]
        %v587 = vld [vmem:[%s230 + $0x4] sm:$0xf]
        %v588 = vld [vmem:[%s230 + $0x8] sm:$0xf]
        %v589 = vld [vmem:[%s230 + $0xc] sm:$0xf]
        %v590 = vld [vmem:[%s230 + $0x10] sm:$0xf]
        %v591 = vld [vmem:[%s230 + $0x14] sm:$0xf]
        %v592 = vld [vmem:[%s230 + $0x18] sm:$0xf]
        %v593 = vld [vmem:[%s230 + $0x1c] sm:$0xf]
        %v594 = vld [vmem:[%s230 + $0x20] sm:$0xf]
        %v595 = vld [vmem:[%s230 + $0x24] sm:$0xf]
        %v596 = vld [vmem:[%s230 + $0x28] sm:$0xf]
        %v597 = vld [vmem:[%s230 + $0x2c] sm:$0xf]
        %v598 = vld [vmem:[%s230 + $0x30] sm:$0xf]
        %v599 = vld [vmem:[%s230 + $0x34] sm:$0xf]
        %v600 = vld [vmem:[%s230 + $0x38] sm:$0xf]
        %v601 = vld [vmem:[%s230 + $0x3c] sm:$0xf]
        %v602 = vunpack.c.l.bf16 %v586
        %v603 = vunpack.c.l.bf16 %v587
        %v604 = vunpack.c.l.bf16 %v588
        %v605 = vunpack.c.l.bf16 %v589
        %v606 = vunpack.c.l.bf16 %v590
        %v607 = vunpack.c.l.bf16 %v591
        %v608 = vunpack.c.l.bf16 %v592
        %v609 = vunpack.c.l.bf16 %v593
        %v610 = vunpack.c.l.bf16 %v594
        %v611 = vunpack.c.l.bf16 %v595
        %v612 = vunpack.c.l.bf16 %v596
        %v613 = vunpack.c.l.bf16 %v597
        %v614 = vunpack.c.l.bf16 %v598
        %v615 = vunpack.c.l.bf16 %v599
        %v616 = vunpack.c.l.bf16 %v600
        %v617 = vunpack.c.l.bf16 %v601
        %v618 = vadd.f32 %v602, 1.0
        %v619 = vadd.f32 %v603, 1.0
        %v620 = vadd.f32 %v604, 1.0
        %v621 = vadd.f32 %v605, 1.0
        %v622 = vadd.f32 %v606, 1.0
        %v623 = vadd.f32 %v607, 1.0
        %v624 = vadd.f32 %v608, 1.0
        %v625 = vadd.f32 %v609, 1.0
        %v626 = vadd.f32 %v610, 1.0
        %v627 = vadd.f32 %v611, 1.0
        %v628 = vadd.f32 %v612, 1.0
        %v629 = vadd.f32 %v613, 1.0
        %v630 = vadd.f32 %v614, 1.0
        %v631 = vadd.f32 %v615, 1.0
        %v632 = vadd.f32 %v616, 1.0
        %v633 = vadd.f32 %v617, 1.0
        %v634 = vadd.f32 %v618, %v583
        %v635 = vadd.f32 %v619, %v585
        %v636 = vadd.f32 %v620, %v583
        %v637 = vadd.f32 %v621, %v585
        %v638 = vadd.f32 %v622, %v583
        %v639 = vadd.f32 %v623, %v585
        %v640 = vadd.f32 %v624, %v583
        %v641 = vadd.f32 %v625, %v585
        %v642 = vadd.f32 %v626, %v583
        %v643 = vadd.f32 %v627, %v585
        %v644 = vadd.f32 %v628, %v583
        %v645 = vadd.f32 %v629, %v585
        %v646 = vadd.f32 %v630, %v583
        %v647 = vadd.f32 %v631, %v585
        %v648 = vadd.f32 %v632, %v583
        %v649 = vadd.f32 %v633, %v585
        %v650 = vmul.f32 %v247, %v634
        %v651 = vmul.f32 %v248, %v635
        %v652 = vmul.f32 %v249, %v636
        %v653 = vmul.f32 %v250, %v637
        %v654 = vmul.f32 %v251, %v638
        %v655 = vmul.f32 %v252, %v639
        %v656 = vmul.f32 %v253, %v640
        %v657 = vmul.f32 %v254, %v641
        %v658 = vmul.f32 %v255, %v642
        %v659 = vmul.f32 %v256, %v643
        %v660 = vmul.f32 %v257, %v644
        %v661 = vmul.f32 %v258, %v645
        %v662 = vmul.f32 %v259, %v646
        %v663 = vmul.f32 %v260, %v647
        %v664 = vmul.f32 %v261, %v648
        %v665 = vmul.f32 %v262, %v649
        %666 = vst.msk [vmem:[%s220] sm:$0xff] %vm271, %v650
        %667 = vst.msk [vmem:[%s220 + $0x8] sm:$0xff] %vm271, %v651
        %668 = vst.msk [vmem:[%s220 + $0x10] sm:$0xff] %vm271, %v652
        %669 = vst.msk [vmem:[%s220 + $0x18] sm:$0xff] %vm271, %v653
        %670 = vst.msk [vmem:[%s220 + $0x20] sm:$0xff] %vm271, %v654
        %671 = vst.msk [vmem:[%s220 + $0x28] sm:$0xff] %vm271, %v655
        %672 = vst.msk [vmem:[%s220 + $0x30] sm:$0xff] %vm271, %v656
        %673 = vst.msk [vmem:[%s220 + $0x38] sm:$0xff] %vm271, %v657
        %674 = vst.msk [vmem:[%s220 + $0x40] sm:$0xff] %vm271, %v658
        %675 = vst.msk [vmem:[%s220 + $0x48] sm:$0xff] %vm271, %v659
        %676 = vst.msk [vmem:[%s220 + $0x50] sm:$0xff] %vm271, %v660
        %677 = vst.msk [vmem:[%s220 + $0x58] sm:$0xff] %vm271, %v661
        %678 = vst.msk [vmem:[%s220 + $0x60] sm:$0xff] %vm271, %v662
        %679 = vst.msk [vmem:[%s220 + $0x68] sm:$0xff] %vm271, %v663
        %680 = vst.msk [vmem:[%s220 + $0x70] sm:$0xff] %vm271, %v664
        %681 = vst.msk [vmem:[%s220 + $0x78] sm:$0xff] %vm271, %v665
        %s682 = sand.u32 %s122, 1
        %s683 = scalar_lea.sflag [#allocation6], %s682
        %s684 = sand.u32 %s122, 1
        %s685 = smul.addr %s684, 128
        %s686 = scalar_lea.vmem [#allocation8], %s685
        // Predicated region
        $region41: #{rfsw_forward.3} parent=35 // pred_check
          %p687 = pneg %p132
        $region42: #{rfsw_forward.3} parent=35 // pred_check_branch
          %689 = sbr.rel (%p687) target = $region44
        $region43: #{rfsw_forward.3} parent=35 // pred_region
          %s691 = ssub.s32 2048, 2048
          %692 = vsyncadd %s683, %s691
          %s693 = smul.addr %s20, 16
          %s694 = smul.addr %s693, 128
          %s695 = scalar_lea.hbm %s4, %s694
          %s696 = sshll.u32 %s686, 4
          %s697 = int_to_ptr.vmem [resolvable:$true] %s696
          %702 = dma.vmem_to_hbm [thread:$0]  %s697, 2048, %s695, %s683, 128, 128, 8
        $region44: #{rfsw_forward.3} parent=35 // pred_fallthru
          _
      $region36: #{rfsw_forward.3} parent=5 // pred_fallthru
        _
      %p703 = scmp.le.s32.totalorder 2, %s15
      // Predicated region
      $region45: #{rfsw_forward.3} parent=5 // pred_check
        %p704 = pneg %p703
      $region46: #{rfsw_forward.3} parent=5 // pred_check_branch
        %706 = sbr.rel (%p704) target = $region48
      $region47: #{rfsw_forward.3} parent=5 // pred_region
        %s707 = ssub.s32 %s15, 2
        // Predicated region
        $region49: #{rfsw_forward.3} parent=47 // pred_check
          %p708 = pneg %p138
        $region50: #{rfsw_forward.3} parent=47 // pred_check_branch
          %710 = sbr.rel (%p708) target = $region52
        $region51: #{rfsw_forward.3} parent=47 // pred_region
          %s711 = sand.u32 %s123, 1
          %s712 = scalar_lea.sflag [#allocation6], %s711
          %s713 = sand.u32 %s123, 1
          %s714 = smul.addr %s713, 128
          %s715 = scalar_lea.vmem [#allocation8], %s714
          %716 = dma.done %s712, 2048
        $region52: #{rfsw_forward.3} parent=47 // pred_fallthru
          _
      $region48: #{rfsw_forward.3} parent=5 // pred_fallthru
        _
    $region6: #{rfsw_forward.3} parent=1 // loop_footer
      %s19 = sadd.s32 1, %s15
    $region7: #{rfsw_forward.3} parent=1 // loop_footer_branch
      %14 = sbr.rel target = $region3
    $region8: #{rfsw_forward.3} parent=1 // loop_exit
      _
    %717 = vsyncpa [#allocation6], 1
    %s718 = scalar_lea.sflag [#allocation6], 1
    %719 = vsyncpa %s718, 1
    %720 = vsyncpa [#allocation7], 1
    %s721 = scalar_lea.sflag [#allocation7], 1
    %722 = vsyncpa %s721, 1

// kernel: rfsw_forward.2
$region0: #{rfsw_forward.2}
  #allocation0 [shape = 'u32[]', space=smem, size = 0x4, offset = 0x4, fixed_abs, tag = 'smem constant byte address 0x4 - core index']
  #allocation1 [shape = 'u32[144,128]{1,0:T(1,128)}', space=vmem, size = 0x12000, scoped, tag = 'internal scratch']
  %s0 = inlined_call_operand.vmem [shape: bf16[2,36,256], index: 0, kind: input, shape index: {}]
  %s1 = inlined_call_operand.vmem [shape: f32[2,4,256], index: 1, kind: input, shape index: {}]
  %s2 = inlined_call_operand.vmem [shape: bf16[8,36], index: 2, kind: input, shape index: {}]
  %s3 = inlined_call_operand.vmem [shape: f32[8,1], index: 3, kind: input, shape index: {}]
  %s4 = inlined_call_operand.vmem [shape: f32[9,4], index: 4, kind: input, shape index: {}]
  %s5 = inlined_call_operand.vmem [shape: bf16[4,8,9], index: 5, kind: input, shape index: {}]
  %s6 = inlined_call_operand.vmem [shape: f32[8,1], index: 6, kind: input, shape index: {}]
  %s7 = inlined_call_operand.vmem [shape: bf16[2,8,256], index: 7, kind: output, shape index: {0}]
  %s8 = inlined_call_operand.vmem [shape: bf16[2,8,256], index: 8, kind: output, shape index: {1}]
  %9 = xla_tuple %s7, %s8
  %s10 = sld [smem:[#allocation0]]
  $region69: #{rfsw_forward.2} parent=0
    _
  %s12 = ssub.s32 1, %s10
  %s13 = scalar_select 0, %s12, %s10
  loop: start=0, step=1, limit=4
  $region2: #{rfsw_forward.2} parent=0 // loop_pre_header
    _
  $region3: #{rfsw_forward.2} parent=0 // loop_header
    %s15 = sphi 0, %s19
    %p16 = scmp.ge.s32.totalorder %s15, 4
    %s22 = sphi 0, %s34
    %s23 = sphi 0, %s30
    %s24 = sphi 0, %s22
    %s25 = sphi 0, %s23
    %s26 = sphi 0, %s24
    %s27 = sphi 0, %s25
    %s39 = sphi 0, %s41
    %s42 = sphi 0, %s39
    %s43 = sphi 0, %s42
    %s59 = sphi 0, %s43
    %s67 = sphi 0, %s69
    %s70 = sphi 0, %s67
    %s71 = sphi 0, %s70
    %s87 = sphi 0, %s71
    %s91 = sphi 0, %s91
    %s93 = sphi 0, %s91
    %s94 = sphi 0, %s93
    %s108 = sphi 0, %s94
    %s112 = sphi 0, %s112
    %s114 = sphi 0, %s112
    %s115 = sphi 0, %s114
    %s129 = sphi 0, %s115
    %s133 = sphi 0, %s133
    %s135 = sphi 0, %s133
    %s136 = sphi 0, %s135
    %s150 = sphi 0, %s136
    %s154 = sphi 0, %s154
    %s156 = sphi 0, %s154
    %s157 = sphi 0, %s156
    %s171 = sphi 0, %s157
    %s175 = sphi 0, %s175
    %s177 = sphi 0, %s175
    %s178 = sphi 0, %s177
    %s192 = sphi 0, %s178
    %s200 = sphi 0, %s202
    %s203 = sphi 0, %s200
    %s204 = sphi 0, %s203
    %s220 = sphi 0, %s204
    %s228 = sphi 0, %s230
    %s231 = sphi 0, %s228
    %s232 = sphi 0, %s231
    %s248 = sphi 0, %s232
  $region4: #{rfsw_forward.2} parent=0 // loop_header_branch
    %18 = sbr.rel (%p16) target = $region8
  $region5: #{rfsw_forward.2} parent=0 // loop_body
    %s20 = ssub.s32 %s15, 1
    %s21 = ssub.s32 %s15, 2
    %s28 = sadd.s32 1, %s23
    %p29 = scmp.ge.s32.totalorder %s28, 1
    %s30 = scalar_select %p29, 0, %s28
    %s31 = sadd.s32 1, %s22
    %s32 = scalar_select %p29, %s31, %s22
    %p33 = scmp.ge.s32.totalorder %s32, 2
    %s34 = scalar_select %p33, 0, %s32
    %s35 = ssub.s32 %s22, %s34
    %s36 = ssub.s32 %s23, %s30
    %s37 = sor.u32 %s35, %s36
    %p38 = scmp.eq.s32.totalorder %s37, 0
    %s40 = sadd.s32 %s39, 1
    %s41 = scalar_select %p38, %s39, %s40
    %p44 = pneg %p38
    %p45 = scmp.eq.s32.totalorder %s15, 1
    %p46 = por %p44, %p45
    %p47 = scmp.ne.s32.totalorder %s39, %s42
    %p48 = scmp.eq.s32.totalorder %s15, 0
    %p49 = por %p47, %p48
    %p50 = scmp.ne.s32.totalorder %s39, %s42
    %p51 = scmp.eq.s32.totalorder %s20, 1
    %p52 = por %p50, %p51
    %p53 = scmp.ne.s32.totalorder %s42, %s43
    %p54 = scmp.eq.s32.totalorder %s20, 0
    %p55 = por %p53, %p54
    %p56 = scmp.ne.s32.totalorder %s42, %s43
    %p57 = scmp.eq.s32.totalorder %s21, 1
    %p58 = por %p56, %p57
    %p60 = scmp.ne.s32.totalorder %s43, %s59
    %p61 = scmp.eq.s32.totalorder %s21, 0
    %p62 = por %p60, %p61
    %s63 = ssub.s32 %s22, %s34
    %s64 = ssub.s32 %s23, %s30
    %s65 = sor.u32 %s63, %s64
    %p66 = scmp.eq.s32.totalorder %s65, 0
    %s68 = sadd.s32 %s67, 1
    %s69 = scalar_select %p66, %s67, %s68
    %p72 = pneg %p66
    %p73 = scmp.eq.s32.totalorder %s15, 1
    %p74 = por %p72, %p73
    %p75 = scmp.ne.s32.totalorder %s67, %s70
    %p76 = scmp.eq.s32.totalorder %s15, 0
    %p77 = por %p75, %p76
    %p78 = scmp.ne.s32.totalorder %s67, %s70
    %p79 = scmp.eq.s32.totalorder %s20, 1
    %p80 = por %p78, %p79
    %p81 = scmp.ne.s32.totalorder %s70, %s71
    %p82 = scmp.eq.s32.totalorder %s20, 0
    %p83 = por %p81, %p82
    %p84 = scmp.ne.s32.totalorder %s70, %s71
    %p85 = scmp.eq.s32.totalorder %s21, 1
    %p86 = por %p84, %p85
    %p88 = scmp.ne.s32.totalorder %s71, %s87
    %p89 = scmp.eq.s32.totalorder %s21, 0
    %p90 = por %p88, %p89
    %s92 = sadd.s32 %s91, 1
    %p95 = scmp.eq.s32.totalorder %s15, 1
    %p96 = scmp.ne.s32.totalorder %s91, %s93
    %p97 = scmp.eq.s32.totalorder %s15, 0
    %p98 = por %p96, %p97
    %p99 = scmp.ne.s32.totalorder %s91, %s93
    %p100 = scmp.eq.s32.totalorder %s20, 1
    %p101 = por %p99, %p100
    %p102 = scmp.ne.s32.totalorder %s93, %s94
    %p103 = scmp.eq.s32.totalorder %s20, 0
    %p104 = por %p102, %p103
    %p105 = scmp.ne.s32.totalorder %s93, %s94
    %p106 = scmp.eq.s32.totalorder %s21, 1
    %p107 = por %p105, %p106
    %p109 = scmp.ne.s32.totalorder %s94, %s108
    %p110 = scmp.eq.s32.totalorder %s21, 0
    %p111 = por %p109, %p110
    %s113 = sadd.s32 %s112, 1
    %p116 = scmp.eq.s32.totalorder %s15, 1
    %p117 = scmp.ne.s32.totalorder %s112, %s114
    %p118 = scmp.eq.s32.totalorder %s15, 0
    %p119 = por %p117, %p118
    %p120 = scmp.ne.s32.totalorder %s112, %s114
    %p121 = scmp.eq.s32.totalorder %s20, 1
    %p122 = por %p120, %p121
    %p123 = scmp.ne.s32.totalorder %s114, %s115
    %p124 = scmp.eq.s32.totalorder %s20, 0
    %p125 = por %p123, %p124
    %p126 = scmp.ne.s32.totalorder %s114, %s115
    %p127 = scmp.eq.s32.totalorder %s21, 1
    %p128 = por %p126, %p127
    %p130 = scmp.ne.s32.totalorder %s115, %s129
    %p131 = scmp.eq.s32.totalorder %s21, 0
    %p132 = por %p130, %p131
    %s134 = sadd.s32 %s133, 1
    %p137 = scmp.eq.s32.totalorder %s15, 1
    %p138 = scmp.ne.s32.totalorder %s133, %s135
    %p139 = scmp.eq.s32.totalorder %s15, 0
    %p140 = por %p138, %p139
    %p141 = scmp.ne.s32.totalorder %s133, %s135
    %p142 = scmp.eq.s32.totalorder %s20, 1
    %p143 = por %p141, %p142
    %p144 = scmp.ne.s32.totalorder %s135, %s136
    %p145 = scmp.eq.s32.totalorder %s20, 0
    %p146 = por %p144, %p145
    %p147 = scmp.ne.s32.totalorder %s135, %s136
    %p148 = scmp.eq.s32.totalorder %s21, 1
    %p149 = por %p147, %p148
    %p151 = scmp.ne.s32.totalorder %s136, %s150
    %p152 = scmp.eq.s32.totalorder %s21, 0
    %p153 = por %p151, %p152
    %s155 = sadd.s32 %s154, 1
    %p158 = scmp.eq.s32.totalorder %s15, 1
    %p159 = scmp.ne.s32.totalorder %s154, %s156
    %p160 = scmp.eq.s32.totalorder %s15, 0
    %p161 = por %p159, %p160
    %p162 = scmp.ne.s32.totalorder %s154, %s156
    %p163 = scmp.eq.s32.totalorder %s20, 1
    %p164 = por %p162, %p163
    %p165 = scmp.ne.s32.totalorder %s156, %s157
    %p166 = scmp.eq.s32.totalorder %s20, 0
    %p167 = por %p165, %p166
    %p168 = scmp.ne.s32.totalorder %s156, %s157
    %p169 = scmp.eq.s32.totalorder %s21, 1
    %p170 = por %p168, %p169
    %p172 = scmp.ne.s32.totalorder %s157, %s171
    %p173 = scmp.eq.s32.totalorder %s21, 0
    %p174 = por %p172, %p173
    %s176 = sadd.s32 %s175, 1
    %p179 = scmp.eq.s32.totalorder %s15, 1
    %p180 = scmp.ne.s32.totalorder %s175, %s177
    %p181 = scmp.eq.s32.totalorder %s15, 0
    %p182 = por %p180, %p181
    %p183 = scmp.ne.s32.totalorder %s175, %s177
    %p184 = scmp.eq.s32.totalorder %s20, 1
    %p185 = por %p183, %p184
    %p186 = scmp.ne.s32.totalorder %s177, %s178
    %p187 = scmp.eq.s32.totalorder %s20, 0
    %p188 = por %p186, %p187
    %p189 = scmp.ne.s32.totalorder %s177, %s178
    %p190 = scmp.eq.s32.totalorder %s21, 1
    %p191 = por %p189, %p190
    %p193 = scmp.ne.s32.totalorder %s178, %s192
    %p194 = scmp.eq.s32.totalorder %s21, 0
    %p195 = por %p193, %p194
    %s196 = ssub.s32 %s22, %s34
    %s197 = ssub.s32 %s23, %s30
    %s198 = sor.u32 %s196, %s197
    %p199 = scmp.eq.s32.totalorder %s198, 0
    %s201 = sadd.s32 %s200, 1
    %s202 = scalar_select %p199, %s200, %s201
    %p205 = pneg %p199
    %p206 = scmp.eq.s32.totalorder %s15, 1
    %p207 = por %p205, %p206
    %p208 = scmp.ne.s32.totalorder %s200, %s203
    %p209 = scmp.eq.s32.totalorder %s15, 0
    %p210 = por %p208, %p209
    %p211 = scmp.ne.s32.totalorder %s200, %s203
    %p212 = scmp.eq.s32.totalorder %s20, 1
    %p213 = por %p211, %p212
    %p214 = scmp.ne.s32.totalorder %s203, %s204
    %p215 = scmp.eq.s32.totalorder %s20, 0
    %p216 = por %p214, %p215
    %p217 = scmp.ne.s32.totalorder %s203, %s204
    %p218 = scmp.eq.s32.totalorder %s21, 1
    %p219 = por %p217, %p218
    %p221 = scmp.ne.s32.totalorder %s204, %s220
    %p222 = scmp.eq.s32.totalorder %s21, 0
    %p223 = por %p221, %p222
    %s224 = ssub.s32 %s22, %s34
    %s225 = ssub.s32 %s23, %s30
    %s226 = sor.u32 %s224, %s225
    %p227 = scmp.eq.s32.totalorder %s226, 0
    %s229 = sadd.s32 %s228, 1
    %s230 = scalar_select %p227, %s228, %s229
    %p233 = pneg %p227
    %p234 = scmp.eq.s32.totalorder %s15, 1
    %p235 = por %p233, %p234
    %p236 = scmp.ne.s32.totalorder %s228, %s231
    %p237 = scmp.eq.s32.totalorder %s15, 0
    %p238 = por %p236, %p237
    %p239 = scmp.ne.s32.totalorder %s228, %s231
    %p240 = scmp.eq.s32.totalorder %s20, 1
    %p241 = por %p239, %p240
    %p242 = scmp.ne.s32.totalorder %s231, %s232
    %p243 = scmp.eq.s32.totalorder %s20, 0
    %p244 = por %p242, %p243
    %p245 = scmp.ne.s32.totalorder %s231, %s232
    %p246 = scmp.eq.s32.totalorder %s21, 1
    %p247 = por %p245, %p246
    %p249 = scmp.ne.s32.totalorder %s232, %s248
    %p250 = scmp.eq.s32.totalorder %s21, 0
    %p251 = por %p249, %p250
    %p252 = scmp.le.s32.totalorder 1, %s15
    %p253 = scmp.lt.s32.totalorder %s15, 3
    %p254 = pnand %p252, %p253
    %p255 = pneg %p254
    // Predicated region
    $region9: #{rfsw_forward.2} parent=5 // pred_check
      _
    $region10: #{rfsw_forward.2} parent=5 // pred_check_branch
      %257 = sbr.rel (%p254) target = $region12
    $region11: #{rfsw_forward.2} parent=5 // pred_region
      %s258 = ssub.s32 %s15, 1
      // Predicated region
      $region13: #{rfsw_forward.2} parent=11 // pred_check
        %p259 = pneg %p104
      $region14: #{rfsw_forward.2} parent=11 // pred_check_branch
        %261 = sbr.rel (%p259) target = $region16
      $region15: #{rfsw_forward.2} parent=11 // pred_region
        _
      $region16: #{rfsw_forward.2} parent=11 // pred_fallthru
        _
      // Predicated region
      $region17: #{rfsw_forward.2} parent=11 // pred_check
        %p262 = pneg %p125
      $region18: #{rfsw_forward.2} parent=11 // pred_check_branch
        %264 = sbr.rel (%p262) target = $region20
      $region19: #{rfsw_forward.2} parent=11 // pred_region
        _
      $region20: #{rfsw_forward.2} parent=11 // pred_fallthru
        _
      // Predicated region
      $region21: #{rfsw_forward.2} parent=11 // pred_check
        %p265 = pneg %p146
      $region22: #{rfsw_forward.2} parent=11 // pred_check_branch
        %267 = sbr.rel (%p265) target = $region24
      $region23: #{rfsw_forward.2} parent=11 // pred_region
        _
      $region24: #{rfsw_forward.2} parent=11 // pred_fallthru
        _
      // Predicated region
      $region25: #{rfsw_forward.2} parent=11 // pred_check
        %p268 = pneg %p167
      $region26: #{rfsw_forward.2} parent=11 // pred_check_branch
        %270 = sbr.rel (%p268) target = $region28
      $region27: #{rfsw_forward.2} parent=11 // pred_region
        _
      $region28: #{rfsw_forward.2} parent=11 // pred_fallthru
        _
      // Predicated region
      $region29: #{rfsw_forward.2} parent=11 // pred_check
        %p271 = pneg %p188
      $region30: #{rfsw_forward.2} parent=11 // pred_check_branch
        %273 = sbr.rel (%p271) target = $region32
      $region31: #{rfsw_forward.2} parent=11 // pred_region
        _
      $region32: #{rfsw_forward.2} parent=11 // pred_fallthru
        _
    $region12: #{rfsw_forward.2} parent=5 // pred_fallthru
      _
    %p274 = scmp.lt.s32.totalorder %s15, 2
    // Predicated region
    $region33: #{rfsw_forward.2} parent=5 // pred_check
      %p275 = pneg %p274
    $region34: #{rfsw_forward.2} parent=5 // pred_check_branch
      %277 = sbr.rel (%p275) target = $region36
    $region35: #{rfsw_forward.2} parent=5 // pred_region
      // Predicated region
      $region37: #{rfsw_forward.2} parent=35 // pred_check
        %p278 = pneg %p49
      $region38: #{rfsw_forward.2} parent=35 // pred_check_branch
        %280 = sbr.rel (%p278) target = $region40
      $region39: #{rfsw_forward.2} parent=35 // pred_region
        %s281 = smul.u32 2, %s23
        %p282 = scmp.lt.s32.totalorder %s22, 1
        %s283 = scalar_select %p282, %s22, 1
        %p284 = scmp.lt.s32.totalorder %s281, 1
        %s285 = scalar_select %p284, %s281, 1
        %s286 = smul.addr %s283, 10
        %s287 = sadd.s32 %s285, %s286
        %s288 = smul.addr %s287, 4
        %s289 = scalar_lea.vmem %s0, %s288
        %s290 = smul.u32 2, %s23
      $region40: #{rfsw_forward.2} parent=35 // pred_fallthru
        _
      // Predicated region
      $region41: #{rfsw_forward.2} parent=35 // pred_check
        %p291 = pneg %p77
      $region42: #{rfsw_forward.2} parent=35 // pred_check_branch
        %293 = sbr.rel (%p291) target = $region44
      $region43: #{rfsw_forward.2} parent=35 // pred_region
        %s294 = smul.u32 2, %s23
        %p295 = scmp.lt.s32.totalorder %s22, 1
        %s296 = scalar_select %p295, %s22, 1
        %p297 = scmp.lt.s32.totalorder %s294, 1
        %s298 = scalar_select %p297, %s294, 1
        %s299 = smul.addr %s296, 2
        %s300 = sadd.s32 %s298, %s299
        %s301 = smul.addr %s300, 4
        %s302 = scalar_lea.vmem %s1, %s301
        %s303 = smul.u32 2, %s23
      $region44: #{rfsw_forward.2} parent=35 // pred_fallthru
        _
    $region36: #{rfsw_forward.2} parent=5 // pred_fallthru
      _
    %p304 = scmp.le.s32.totalorder 1, %s15
    %p305 = scmp.lt.s32.totalorder %s15, 3
    %p306 = pnand %p304, %p305
    %p307 = pneg %p306
    // Predicated region
    $region45: #{rfsw_forward.2} parent=5 // pred_check
      _
    $region46: #{rfsw_forward.2} parent=5 // pred_check_branch
      %309 = sbr.rel (%p306) target = $region48
    $region47: #{rfsw_forward.2} parent=5 // pred_region
      %s310 = ssub.s32 %s15, 1
      %s311 = smul.u32 2, %s25
      %p312 = scmp.lt.s32.totalorder %s24, 1
      %s313 = scalar_select %p312, %s24, 1
      %p314 = scmp.lt.s32.totalorder %s311, 1
      %s315 = scalar_select %p314, %s311, 1
      %s316 = smul.addr %s313, 10
      %s317 = sadd.s32 %s315, %s316
      %s318 = smul.addr %s317, 4
      %s319 = scalar_lea.vmem %s0, %s318
      %p320 = pneg %p55
      %p321 = pneg %p52
      %s322 = smul.u32 2, %s25
      %p323 = scmp.lt.s32.totalorder %s24, 1
      %s324 = scalar_select %p323, %s24, 1
      %p325 = scmp.lt.s32.totalorder %s322, 1
      %s326 = scalar_select %p325, %s322, 1
      %s327 = smul.addr %s324, 2
      %s328 = sadd.s32 %s326, %s327
      %s329 = smul.addr %s328, 4
      %s330 = scalar_lea.vmem %s1, %s329
      %p331 = pneg %p83
      %p332 = pneg %p80
      %p333 = pneg %p104
      %p334 = pneg %p101
      %p335 = pneg %p125
      %p336 = pneg %p122
      %p337 = pneg %p146
      %p338 = pneg %p143
      %p339 = pneg %p167
      %p340 = pneg %p164
      %p341 = pneg %p188
      %p342 = pneg %p185
      %p343 = pneg %p216
      %p344 = pneg %p213
      %s345 = smul.u32 2, %s25
      %p346 = scmp.lt.s32.totalorder %s24, 1
      %s347 = scalar_select %p346, %s24, 1
      %p348 = scmp.lt.s32.totalorder %s345, 1
      %s349 = scalar_select %p348, %s345, 1
      %s350 = smul.addr %s347, 2
      %s351 = sadd.s32 %s349, %s350
      %s352 = smul.addr %s351, 4
      %s353 = scalar_lea.vmem %s7, %s352
      %p354 = pneg %p244
      %p355 = pneg %p241
      %s356 = smul.u32 2, %s25
      %p357 = scmp.lt.s32.totalorder %s24, 1
      %s358 = scalar_select %p357, %s24, 1
      %p359 = scmp.lt.s32.totalorder %s356, 1
      %s360 = scalar_select %p359, %s356, 1
      %s361 = smul.addr %s358, 2
      %s362 = sadd.s32 %s360, %s361
      %s363 = smul.addr %s362, 4
      %s364 = scalar_lea.vmem %s8, %s363
      %s365 = smul.u32 2, %s25
      %p366 = scmp.lt.s32.totalorder %s24, 1
      %s367 = scalar_select %p366, %s24, 1
      %p368 = scmp.lt.s32.totalorder %s365, 1
      %s369 = scalar_select %p368, %s365, 1
      %s370 = smul.addr %s367, 10
      %s371 = sadd.s32 %s369, %s370
      %s372 = smul.addr %s371, 4
      %s373 = scalar_lea.vmem %s0, %s372
      %s374 = smul.u32 2, %s25
      %s375 = smul.u32 2, %s25
      %p376 = scmp.lt.s32.totalorder %s24, 1
      %s377 = scalar_select %p376, %s24, 1
      %p378 = scmp.lt.s32.totalorder %s375, 1
      %s379 = scalar_select %p378, %s375, 1
      %s380 = smul.addr %s377, 2
      %s381 = sadd.s32 %s379, %s380
      %s382 = smul.addr %s381, 4
      %s383 = scalar_lea.vmem %s1, %s382
      %s384 = smul.u32 2, %s25
      %s385 = smul.u32 2, %s25
      %p386 = scmp.lt.s32.totalorder %s24, 1
      %s387 = scalar_select %p386, %s24, 1
      %p388 = scmp.lt.s32.totalorder %s385, 1
      %s389 = scalar_select %p388, %s385, 1
      %s390 = smul.addr %s387, 2
      %s391 = sadd.s32 %s389, %s390
      %s392 = smul.addr %s391, 4
      %s393 = scalar_lea.vmem %s7, %s392
      %s394 = smul.u32 2, %s25
      %s395 = smul.u32 2, %s25
      %p396 = scmp.lt.s32.totalorder %s24, 1
      %s397 = scalar_select %p396, %s24, 1
      %p398 = scmp.lt.s32.totalorder %s395, 1
      %s399 = scalar_select %p398, %s395, 1
      %s400 = smul.addr %s397, 2
      %s401 = sadd.s32 %s399, %s400
      %s402 = smul.addr %s401, 4
      %s403 = scalar_lea.vmem %s8, %s402
      %s404 = smul.u32 2, %s25
      %v406 = vld [vmem:[%s2] sm:$0xf]
      %v407 = vld [vmem:[%s373] sm:$0xff]
      %v408 = vld [vmem:[%s373 + $0x8] sm:$0xff]
      %v409 = vld [vmem:[%s373 + $0x10] sm:$0xff]
      %v410 = vld [vmem:[%s373 + $0x18] sm:$0xff]
      %v411 = vld [vmem:[%s373 + $0x20] sm:$0x33]
      %v412 = vld [vmem:[%s3] sm:$0xff]
      %414 = vset.pattern.permute.xlu0 0
      %415 = vperm.xlu0 %414, %v412
      %v416 = vpop.permute.xlu0 %415
      %v423 = vunpack.c.l.b16 %v407
      %v424 = vunpack.c.h.b16 %v407
      %v425 = vunpack.c.l.b16 %v408
      %v426 = vunpack.c.h.b16 %v408
      %v427 = vunpack.c.l.b16 %v409
      %v428 = vunpack.c.h.b16 %v409
      %v429 = vunpack.c.l.b16 %v410
      %v430 = vunpack.c.h.b16 %v410
      %v431 = vunpack.c.l.b16 %v411
      %v432 = vunpack.c.h.b16 %v411
      %v433 = vpack.c.b16 %v425, %v423
      %v434 = vpack.c.b16 %v426, %v424
      %v435 = vpack.c.b16 %v429, %v427
      %v436 = vpack.c.b16 %v430, %v428
      %v437 = vpack.c.b16 %v431, %v431
      %v438 = vpack.c.b16 %v432, %v432
      %vm443 = vcmask 293888
      %v445 = vsel %vm443, %v406, 0
      %vm447 = vcmask 1041408
      %v449 = vsel %vm447, %v437, 0
      %v452 = vsel %vm447, %v438, 0
      %454 = vmatprep.subr.bf16.mxu0 0
      %455 = vmatpush1.bf16.msra.mxu0 0
      %456 = vmatprep.subr.bf16.mxu0 0
      %457 = vmatpush1.bf16.msra.mxu0 0
      %458 = vmatprep.subr.bf16.mxu0 0
      %459 = vmatpush1.bf16.msra.mxu0 0
      %460 = vmatprep.subr.bf16.mxu0 0
      %461 = vmatpush1.bf16.msra.mxu0 0
      %462 = vmatprep.subr.bf16.mxu0 0
      %463 = vmatpush1.bf16.msra.mxu0 0
      %464 = vmatprep.subr.bf16.mxu0 %v452
      %465 = vmatpush1.bf16.msra.mxu0 %v449
      %466 = vmatprep.subr.bf16.mxu0 %v436
      %467 = vmatpush1.bf16.msra.mxu0 %v435
      %468 = vmatprep.subr.bf16.mxu0 %v434
      %469 = vmatpush1.bf16.msra.mxu0 %v433
      %470 = vmatprep.subr.bf16.mxu0 0
      %471 = vmatpush2.bf16.msra.mxu0 0
      %472 = vmatprep.subr.bf16.mxu0 0
      %473 = vmatpush2.bf16.msra.mxu0 0
      %474 = vmatprep.subr.bf16.mxu0 0
      %475 = vmatpush2.bf16.msra.mxu0 0
      %476 = vmatprep.subr.bf16.mxu0 0
      %477 = vmatpush2.bf16.msra.mxu0 0
      %478 = vmatprep.subr.bf16.mxu0 0
      %479 = vmatpush2.bf16.msra.mxu0 0
      %480 = vmatprep.subr.bf16.mxu0 0
      %481 = vmatpush2.bf16.msra.mxu0 0
      %482 = vmatprep.subr.bf16.mxu0 0
      %483 = vmatpush2.bf16.msra.mxu0 0
      %484 = vmatprep.subr.bf16.mxu0 0
      %485 = vmatpush2.bf16.msra.mxu0 0
      %486 = vmatprep.mubr.bf16.mxu0 0
      %487 = vmatmul.mubr.bf16.gmra.mxu0 %v445
      %v488 = vpop.f32.mrf.mxu0
      %v489 = vadd.f32 %v416, %v488
      %v490 = vpop.f32.mrf.mxu0
      %v491 = vadd.f32 %v416, %v490
      %v492 = vpop.f32.mrf.mxu0
      %v493 = vpop.f32.mrf.mxu0
      %494 = vdwg.mxu0
      %v495 = vxor.u32 %v489, 2147483648
      %v496 = vxor.u32 %v491, 2147483648
      %v497 = vmul.f32 %v495, 1.442695
      %v498 = vpow.pop %v497
      %v499 = vmul.f32 %v496, 1.442695
      %v500 = vpow.pop %v499
      %v501 = vadd.f32 %v498, 1.0
      %v502 = vadd.f32 %v500, 1.0
      %v503 = vrcp.pop %v501
      %v504 = vmul.f32 1.0, %v503
      %v505 = vrcp.pop %v502
      %v506 = vmul.f32 1.0, %v505
      %v507 = vmul.f32 %v489, %v504
      %v508 = vmul.f32 %v491, %v506
      %v509 = vpack.c.bf16 %v507, %v507
      %v510 = vpack.c.bf16 %v508, %v508
      %v513 = vunpack.c.l.b16 %v509
      %v514 = vunpack.c.l.b16 %v510
      %v515 = vpack.c.b16 %v514, %v513
      %517 = vst [vmem:[%s393] sm:$0xff] %v515
      %v518 = vld [vmem:[%s383] sm:$0xff]
      %v519 = vld [vmem:[%s4] sm:$0xff]
      %v520 = vld [vmem:[%s4 + $0x8] sm:$0x1]
      %522 = vset.pattern.permute.xlu0 0
      %523 = vperm.xlu0 %522, %v519
      %v524 = vpop.permute.xlu0 %523
      %527 = vset.pattern.permute.xlu0 0
      %528 = vperm.xlu0 %527, %v520
      %v529 = vpop.permute.xlu0 %528
      %v532 = vlaneseq
      %v533 = vshrl.u32 %v532, 7
      %v534 = vsub.s32 0, %v533
      %v535 = vrot.slane %v518, %v534
      %v536 = vlaneseq
      %v537 = vshrl.u32 %v536, 7
      %v538 = vsub.s32 4, %v537
      %v539 = vrot.slane %v518, %v538
      %v542 = vlaneseq
      %v543 = vshrl.u32 %v542, 7
      %v544 = vsub.s32 0, %v543
      %v545 = vrot.slane %v535, %v544
      %v546 = vlaneseq
      %v547 = vshrl.u32 %v546, 7
      %v548 = vsub.s32 0, %v547
      %v549 = vrot.slane %v539, %v548
      %v550 = vmul.f32 %v524, %v545
      %v551 = vmul.f32 %v524, %v549
      %v552 = vmul.f32 %v529, %v545
      %v553 = vmul.f32 %v529, %v549
      %vm554 = vcmask 1040384
      %v555 = vsel %vm554, %v552, -inf
      %v556 = vmax.f32 %v550, %v555
      %v557 = vrot.slane %v556, 4
      %v558 = vmax.f32 %v556, %v557
      %v559 = vrot.slane %v558, 2
      %v560 = vmax.f32 %v558, %v559
      %v561 = vrot.slane %v560, 1
      %v562 = vmax.f32 %v560, %v561
      %v563 = vsel %vm554, %v553, -inf
      %v564 = vmax.f32 %v551, %v563
      %v565 = vrot.slane %v564, 4
      %v566 = vmax.f32 %v564, %v565
      %v567 = vrot.slane %v566, 2
      %v568 = vmax.f32 %v566, %v567
      %v569 = vrot.slane %v568, 1
      %v570 = vmax.f32 %v568, %v569
      %v571 = vsub.f32 %v550, %v562
      %v572 = vsub.f32 %v551, %v570
      %v573 = vsub.f32 %v552, %v562
      %v574 = vsub.f32 %v553, %v570
      %v575 = vmul.f32 %v571, 1.442695
      %v576 = vpow.pop %v575
      %v577 = vmul.f32 %v572, 1.442695
      %v578 = vpow.pop %v577
      %v579 = vmul.f32 %v573, 1.442695
      %v580 = vpow.pop %v579
      %v581 = vmul.f32 %v574, 1.442695
      %v582 = vpow.pop %v581
      %v583 = vsel %vm554, %v580, 0.0
      %v584 = vadd.f32 %v576, %v583
      %v585 = vrot.slane %v584, 4
      %v586 = vadd.f32 %v584, %v585
      %v587 = vrot.slane %v586, 2
      %v588 = vadd.f32 %v586, %v587
      %v589 = vrot.slane %v588, 1
      %v590 = vadd.f32 %v588, %v589
      %v591 = vsel %vm554, %v582, 0.0
      %v592 = vadd.f32 %v578, %v591
      %v593 = vrot.slane %v592, 4
      %v594 = vadd.f32 %v592, %v593
      %v595 = vrot.slane %v594, 2
      %v596 = vadd.f32 %v594, %v595
      %v597 = vrot.slane %v596, 1
      %v598 = vadd.f32 %v596, %v597
      %v599 = vrcp.pop %v590
      %v600 = vmul.f32 %v576, %v599
      %v601 = vrcp.pop %v598
      %v602 = vmul.f32 %v578, %v601
      %v603 = vmul.f32 %v580, %v599
      %v604 = vmul.f32 %v582, %v601
      %v605 = vpack.c.bf16 %v603, %v600
      %v606 = vpack.c.bf16 %v604, %v602
      %v607 = vld [vmem:[%s5] sm:$0xf]
      %608 = vset.pattern.permute.xlu0 1
      %609 = vperm.xlu0 %608, %v519
      %v610 = vpop.permute.xlu0 %609
      %612 = vset.pattern.permute.xlu0 1
      %613 = vperm.xlu0 %612, %v520
      %v614 = vpop.permute.xlu0 %613
      %v616 = vlaneseq
      %v617 = vshrl.u32 %v616, 7
      %v618 = vsub.s32 1, %v617
      %v619 = vrot.slane %v518, %v618
      %v620 = vlaneseq
      %v621 = vshrl.u32 %v620, 7
      %v622 = vsub.s32 5, %v621
      %v623 = vrot.slane %v518, %v622
      %v626 = vlaneseq
      %v627 = vshrl.u32 %v626, 7
      %v628 = vsub.s32 1, %v627
      %v629 = vrot.slane %v619, %v628
      %v630 = vlaneseq
      %v631 = vshrl.u32 %v630, 7
      %v632 = vsub.s32 1, %v631
      %v633 = vrot.slane %v623, %v632
      %v634 = vmul.f32 %v610, %v629
      %v635 = vmul.f32 %v610, %v633
      %v636 = vmul.f32 %v614, %v629
      %v637 = vmul.f32 %v614, %v633
      %v638 = vsel %vm554, %v636, -inf
      %v639 = vmax.f32 %v634, %v638
      %v640 = vrot.slane %v639, 4
      %v641 = vmax.f32 %v639, %v640
      %v642 = vrot.slane %v641, 2
      %v643 = vmax.f32 %v641, %v642
      %v644 = vrot.slane %v643, 1
      %v645 = vmax.f32 %v643, %v644
      %v646 = vsel %vm554, %v637, -inf
      %v647 = vmax.f32 %v635, %v646
      %v648 = vrot.slane %v647, 4
      %v649 = vmax.f32 %v647, %v648
      %v650 = vrot.slane %v649, 2
      %v651 = vmax.f32 %v649, %v650
      %v652 = vrot.slane %v651, 1
      %v653 = vmax.f32 %v651, %v652
      %v654 = vsub.f32 %v634, %v645
      %v655 = vsub.f32 %v635, %v653
      %v656 = vsub.f32 %v636, %v645
      %v657 = vsub.f32 %v637, %v653
      %v658 = vmul.f32 %v654, 1.442695
      %v659 = vpow.pop %v658
      %v660 = vmul.f32 %v655, 1.442695
      %v661 = vpow.pop %v660
      %v662 = vmul.f32 %v656, 1.442695
      %v663 = vpow.pop %v662
      %v664 = vmul.f32 %v657, 1.442695
      %v665 = vpow.pop %v664
      %v666 = vsel %vm554, %v663, 0.0
      %v667 = vadd.f32 %v659, %v666
      %v668 = vrot.slane %v667, 4
      %v669 = vadd.f32 %v667, %v668
      %v670 = vrot.slane %v669, 2
      %v671 = vadd.f32 %v669, %v670
      %v672 = vrot.slane %v671, 1
      %v673 = vadd.f32 %v671, %v672
      %v674 = vsel %vm554, %v665, 0.0
      %v675 = vadd.f32 %v661, %v674
      %v676 = vrot.slane %v675, 4
      %v677 = vadd.f32 %v675, %v676
      %v678 = vrot.slane %v677, 2
      %v679 = vadd.f32 %v677, %v678
      %v680 = vrot.slane %v679, 1
      %v681 = vadd.f32 %v679, %v680
      %v682 = vrcp.pop %v673
      %v683 = vmul.f32 %v659, %v682
      %v684 = vrcp.pop %v681
      %v685 = vmul.f32 %v661, %v684
      %v686 = vmul.f32 %v663, %v682
      %v687 = vmul.f32 %v665, %v684
      %v688 = vpack.c.bf16 %v686, %v683
      %v689 = vpack.c.bf16 %v687, %v685
      %s690 = scalar_lea.vmem %s5, 4
      %v691 = vld [vmem:[%s690] sm:$0xf]
      %vm692 = vcmask 72704
      %v694 = vsel %vm692, %v691, 0
      %vm696 = vcmask 1043456
      %vm697 = vcmask 1044480
      %v698 = vsel %vm696, 4294967295, 65535
      %v699 = vsel %vm697, %v698, 0
      %v701 = vand.u32 %v688, %v699
      %v704 = vand.u32 %v689, %v699
      %706 = vmatprep.subr.bf16.mxu0 0
      %707 = vmatpush1.bf16.msra.mxu0 0
      %708 = vmatprep.subr.bf16.mxu0 0
      %709 = vmatpush1.bf16.msra.mxu0 0
      %710 = vmatprep.subr.bf16.mxu0 0
      %711 = vmatpush1.bf16.msra.mxu0 0
      %712 = vmatprep.subr.bf16.mxu0 0
      %713 = vmatpush1.bf16.msra.mxu0 0
      %714 = vmatprep.subr.bf16.mxu0 0
      %715 = vmatpush1.bf16.msra.mxu0 0
      %716 = vmatprep.subr.bf16.mxu0 0
      %717 = vmatpush1.bf16.msra.mxu0 0
      %718 = vmatprep.subr.bf16.mxu0 0
      %719 = vmatpush1.bf16.msra.mxu0 0
      %720 = vmatprep.subr.bf16.mxu0 %v704
      %721 = vmatpush1.bf16.msra.mxu0 %v701
      %722 = vmatprep.subr.bf16.mxu0 0
      %723 = vmatpush2.bf16.msra.mxu0 0
      %724 = vmatprep.subr.bf16.mxu0 0
      %725 = vmatpush2.bf16.msra.mxu0 0
      %726 = vmatprep.subr.bf16.mxu0 0
      %727 = vmatpush2.bf16.msra.mxu0 0
      %728 = vmatprep.subr.bf16.mxu0 0
      %729 = vmatpush2.bf16.msra.mxu0 0
      %730 = vmatprep.subr.bf16.mxu0 0
      %731 = vmatpush2.bf16.msra.mxu0 0
      %732 = vmatprep.subr.bf16.mxu0 0
      %733 = vmatpush2.bf16.msra.mxu0 0
      %734 = vmatprep.subr.bf16.mxu0 0
      %735 = vmatpush2.bf16.msra.mxu0 0
      %736 = vmatprep.subr.bf16.mxu0 0
      %737 = vmatpush2.bf16.msra.mxu0 0
      %738 = vmatprep.mubr.bf16.mxu0 0
      %739 = vmatmul.mubr.bf16.gmra.mxu0 %v694
      %v740 = vpop.f32.mrf.mxu0
      %v741 = vadd.f32 0.0, %v740
      %v742 = vpop.f32.mrf.mxu0
      %v743 = vadd.f32 0.0, %v742
      %v744 = vpop.f32.mrf.mxu0
      %v745 = vpop.f32.mrf.mxu0
      %746 = vdwg.mxu0
      %v748 = vsel %vm692, %v607, 0
      %v751 = vand.u32 %v605, %v699
      %v754 = vand.u32 %v606, %v699
      %756 = vmatprep.subr.bf16.mxu0 0
      %757 = vmatpush1.bf16.msra.mxu0 0
      %758 = vmatprep.subr.bf16.mxu0 0
      %759 = vmatpush1.bf16.msra.mxu0 0
      %760 = vmatprep.subr.bf16.mxu0 0
      %761 = vmatpush1.bf16.msra.mxu0 0
      %762 = vmatprep.subr.bf16.mxu0 0
      %763 = vmatpush1.bf16.msra.mxu0 0
      %764 = vmatprep.subr.bf16.mxu0 0
      %765 = vmatpush1.bf16.msra.mxu0 0
      %766 = vmatprep.subr.bf16.mxu0 0
      %767 = vmatpush1.bf16.msra.mxu0 0
      %768 = vmatprep.subr.bf16.mxu0 0
      %769 = vmatpush1.bf16.msra.mxu0 0
      %770 = vmatprep.subr.bf16.mxu0 %v754
      %771 = vmatpush1.bf16.msra.mxu0 %v751
      %772 = vmatprep.subr.bf16.mxu0 0
      %773 = vmatpush2.bf16.msra.mxu0 0
      %774 = vmatprep.subr.bf16.mxu0 0
      %775 = vmatpush2.bf16.msra.mxu0 0
      %776 = vmatprep.subr.bf16.mxu0 0
      %777 = vmatpush2.bf16.msra.mxu0 0
      %778 = vmatprep.subr.bf16.mxu0 0
      %779 = vmatpush2.bf16.msra.mxu0 0
      %780 = vmatprep.subr.bf16.mxu0 0
      %781 = vmatpush2.bf16.msra.mxu0 0
      %782 = vmatprep.subr.bf16.mxu0 0
      %783 = vmatpush2.bf16.msra.mxu0 0
      %784 = vmatprep.subr.bf16.mxu0 0
      %785 = vmatpush2.bf16.msra.mxu0 0
      %786 = vmatprep.subr.bf16.mxu0 0
      %787 = vmatpush2.bf16.msra.mxu0 0
      %788 = vmatprep.mubr.bf16.mxu0 0
      %789 = vmatmul.mubr.bf16.gmra.mxu0 %v748
      %v790 = vpop.f32.mrf.mxu0
      %v791 = vadd.f32 %v741, %v790
      %v792 = vpop.f32.mrf.mxu0
      %v793 = vadd.f32 %v743, %v792
      %v794 = vpop.f32.mrf.mxu0
      %v795 = vpop.f32.mrf.mxu0
      %796 = vdwg.mxu0
      %797 = vset.pattern.permute.xlu0 2
      %798 = vperm.xlu0 %797, %v519
      %v799 = vpop.permute.xlu0 %798
      %801 = vset.pattern.permute.xlu0 2
      %802 = vperm.xlu0 %801, %v520
      %v803 = vpop.permute.xlu0 %802
      %v805 = vlaneseq
      %v806 = vshrl.u32 %v805, 7
      %v807 = vsub.s32 2, %v806
      %v808 = vrot.slane %v518, %v807
      %v809 = vlaneseq
      %v810 = vshrl.u32 %v809, 7
      %v811 = vsub.s32 6, %v810
      %v812 = vrot.slane %v518, %v811
      %v815 = vlaneseq
      %v816 = vshrl.u32 %v815, 7
      %v817 = vsub.s32 2, %v816
      %v818 = vrot.slane %v808, %v817
      %v819 = vlaneseq
      %v820 = vshrl.u32 %v819, 7
      %v821 = vsub.s32 2, %v820
      %v822 = vrot.slane %v812, %v821
      %v823 = vmul.f32 %v799, %v818
      %v824 = vmul.f32 %v799, %v822
      %v825 = vmul.f32 %v803, %v818
      %v826 = vmul.f32 %v803, %v822
      %v827 = vsel %vm554, %v825, -inf
      %v828 = vmax.f32 %v823, %v827
      %v829 = vrot.slane %v828, 4
      %v830 = vmax.f32 %v828, %v829
      %v831 = vrot.slane %v830, 2
      %v832 = vmax.f32 %v830, %v831
      %v833 = vrot.slane %v832, 1
      %v834 = vmax.f32 %v832, %v833
      %v835 = vsel %vm554, %v826, -inf
      %v836 = vmax.f32 %v824, %v835
      %v837 = vrot.slane %v836, 4
      %v838 = vmax.f32 %v836, %v837
      %v839 = vrot.slane %v838, 2
      %v840 = vmax.f32 %v838, %v839
      %v841 = vrot.slane %v840, 1
      %v842 = vmax.f32 %v840, %v841
      %v843 = vsub.f32 %v823, %v834
      %v844 = vsub.f32 %v824, %v842
      %v845 = vsub.f32 %v825, %v834
      %v846 = vsub.f32 %v826, %v842
      %v847 = vmul.f32 %v843, 1.442695
      %v848 = vpow.pop %v847
      %v849 = vmul.f32 %v844, 1.442695
      %v850 = vpow.pop %v849
      %v851 = vmul.f32 %v845, 1.442695
      %v852 = vpow.pop %v851
      %v853 = vmul.f32 %v846, 1.442695
      %v854 = vpow.pop %v853
      %v855 = vsel %vm554, %v852, 0.0
      %v856 = vadd.f32 %v848, %v855
      %v857 = vrot.slane %v856, 4
      %v858 = vadd.f32 %v856, %v857
      %v859 = vrot.slane %v858, 2
      %v860 = vadd.f32 %v858, %v859
      %v861 = vrot.slane %v860, 1
      %v862 = vadd.f32 %v860, %v861
      %v863 = vsel %vm554, %v854, 0.0
      %v864 = vadd.f32 %v850, %v863
      %v865 = vrot.slane %v864, 4
      %v866 = vadd.f32 %v864, %v865
      %v867 = vrot.slane %v866, 2
      %v868 = vadd.f32 %v866, %v867
      %v869 = vrot.slane %v868, 1
      %v870 = vadd.f32 %v868, %v869
      %v871 = vrcp.pop %v862
      %v872 = vmul.f32 %v848, %v871
      %v873 = vrcp.pop %v870
      %v874 = vmul.f32 %v850, %v873
      %v875 = vmul.f32 %v852, %v871
      %v876 = vmul.f32 %v854, %v873
      %v877 = vpack.c.bf16 %v875, %v872
      %v878 = vpack.c.bf16 %v876, %v874
      %s879 = scalar_lea.vmem %s5, 8
      %v880 = vld [vmem:[%s879] sm:$0xf]
      %v882 = vsel %vm692, %v880, 0
      %v885 = vand.u32 %v877, %v699
      %v888 = vand.u32 %v878, %v699
      %890 = vmatprep.subr.bf16.mxu0 0
      %891 = vmatpush1.bf16.msra.mxu0 0
      %892 = vmatprep.subr.bf16.mxu0 0
      %893 = vmatpush1.bf16.msra.mxu0 0
      %894 = vmatprep.subr.bf16.mxu0 0
      %895 = vmatpush1.bf16.msra.mxu0 0
      %896 = vmatprep.subr.bf16.mxu0 0
      %897 = vmatpush1.bf16.msra.mxu0 0
      %898 = vmatprep.subr.bf16.mxu0 0
      %899 = vmatpush1.bf16.msra.mxu0 0
      %900 = vmatprep.subr.bf16.mxu0 0
      %901 = vmatpush1.bf16.msra.mxu0 0
      %902 = vmatprep.subr.bf16.mxu0 0
      %903 = vmatpush1.bf16.msra.mxu0 0
      %904 = vmatprep.subr.bf16.mxu0 %v888
      %905 = vmatpush1.bf16.msra.mxu0 %v885
      %906 = vmatprep.subr.bf16.mxu0 0
      %907 = vmatpush2.bf16.msra.mxu0 0
      %908 = vmatprep.subr.bf16.mxu0 0
      %909 = vmatpush2.bf16.msra.mxu0 0
      %910 = vmatprep.subr.bf16.mxu0 0
      %911 = vmatpush2.bf16.msra.mxu0 0
      %912 = vmatprep.subr.bf16.mxu0 0
      %913 = vmatpush2.bf16.msra.mxu0 0
      %914 = vmatprep.subr.bf16.mxu0 0
      %915 = vmatpush2.bf16.msra.mxu0 0
      %916 = vmatprep.subr.bf16.mxu0 0
      %917 = vmatpush2.bf16.msra.mxu0 0
      %918 = vmatprep.subr.bf16.mxu0 0
      %919 = vmatpush2.bf16.msra.mxu0 0
      %920 = vmatprep.subr.bf16.mxu0 0
      %921 = vmatpush2.bf16.msra.mxu0 0
      %922 = vmatprep.mubr.bf16.mxu0 0
      %923 = vmatmul.mubr.bf16.gmra.mxu0 %v882
      %v924 = vpop.f32.mrf.mxu0
      %v925 = vadd.f32 0.0, %v924
      %v926 = vpop.f32.mrf.mxu0
      %v927 = vadd.f32 0.0, %v926
      %v928 = vpop.f32.mrf.mxu0
      %v929 = vpop.f32.mrf.mxu0
      %930 = vdwg.mxu0
      %v931 = vadd.f32 %v791, %v925
      %v932 = vadd.f32 %v793, %v927
      %933 = vset.pattern.permute.xlu0 3
      %934 = vperm.xlu0 %933, %v519
      %v935 = vpop.permute.xlu0 %934
      %937 = vset.pattern.permute.xlu0 3
      %938 = vperm.xlu0 %937, %v520
      %v939 = vpop.permute.xlu0 %938
      %v941 = vlaneseq
      %v942 = vshrl.u32 %v941, 7
      %v943 = vsub.s32 3, %v942
      %v944 = vrot.slane %v518, %v943
      %v945 = vlaneseq
      %v946 = vshrl.u32 %v945, 7
      %v947 = vsub.s32 7, %v946
      %v948 = vrot.slane %v518, %v947
      %v951 = vlaneseq
      %v952 = vshrl.u32 %v951, 7
      %v953 = vsub.s32 3, %v952
      %v954 = vrot.slane %v944, %v953
      %v955 = vlaneseq
      %v956 = vshrl.u32 %v955, 7
      %v957 = vsub.s32 3, %v956
      %v958 = vrot.slane %v948, %v957
      %v959 = vmul.f32 %v935, %v954
      %v960 = vmul.f32 %v935, %v958
      %v961 = vmul.f32 %v939, %v954
      %v962 = vmul.f32 %v939, %v958
      %v963 = vsel %vm554, %v961, -inf
      %v964 = vmax.f32 %v959, %v963
      %v965 = vrot.slane %v964, 4
      %v966 = vmax.f32 %v964, %v965
      %v967 = vrot.slane %v966, 2
      %v968 = vmax.f32 %v966, %v967
      %v969 = vrot.slane %v968, 1
      %v970 = vmax.f32 %v968, %v969
      %v971 = vsel %vm554, %v962, -inf
      %v972 = vmax.f32 %v960, %v971
      %v973 = vrot.slane %v972, 4
      %v974 = vmax.f32 %v972, %v973
      %v975 = vrot.slane %v974, 2
      %v976 = vmax.f32 %v974, %v975
      %v977 = vrot.slane %v976, 1
      %v978 = vmax.f32 %v976, %v977
      %v979 = vsub.f32 %v959, %v970
      %v980 = vsub.f32 %v960, %v978
      %v981 = vsub.f32 %v961, %v970
      %v982 = vsub.f32 %v962, %v978
      %v983 = vmul.f32 %v979, 1.442695
      %v984 = vpow.pop %v983
      %v985 = vmul.f32 %v980, 1.442695
      %v986 = vpow.pop %v985
      %v987 = vmul.f32 %v981, 1.442695
      %v988 = vpow.pop %v987
      %v989 = vmul.f32 %v982, 1.442695
      %v990 = vpow.pop %v989
      %v991 = vsel %vm554, %v988, 0.0
      %v992 = vadd.f32 %v984, %v991
      %v993 = vrot.slane %v992, 4
      %v994 = vadd.f32 %v992, %v993
      %v995 = vrot.slane %v994, 2
      %v996 = vadd.f32 %v994, %v995
      %v997 = vrot.slane %v996, 1
      %v998 = vadd.f32 %v996, %v997
      %v999 = vsel %vm554, %v990, 0.0
      %v1000 = vadd.f32 %v986, %v999
      %v1001 = vrot.slane %v1000, 4
      %v1002 = vadd.f32 %v1000, %v1001
      %v1003 = vrot.slane %v1002, 2
      %v1004 = vadd.f32 %v1002, %v1003
      %v1005 = vrot.slane %v1004, 1
      %v1006 = vadd.f32 %v1004, %v1005
      %v1007 = vrcp.pop %v998
      %v1008 = vmul.f32 %v984, %v1007
      %v1009 = vrcp.pop %v1006
      %v1010 = vmul.f32 %v986, %v1009
      %v1011 = vmul.f32 %v988, %v1007
      %v1012 = vmul.f32 %v990, %v1009
      %v1013 = vpack.c.bf16 %v1011, %v1008
      %v1014 = vpack.c.bf16 %v1012, %v1010
      %s1015 = scalar_lea.vmem %s5, 12
      %v1016 = vld [vmem:[%s1015] sm:$0xf]
      %v1018 = vsel %vm692, %v1016, 0
      %v1021 = vand.u32 %v1013, %v699
      %v1024 = vand.u32 %v1014, %v699
      %1026 = vmatprep.subr.bf16.mxu0 0
      %1027 = vmatpush1.bf16.msra.mxu0 0
      %1028 = vmatprep.subr.bf16.mxu0 0
      %1029 = vmatpush1.bf16.msra.mxu0 0
      %1030 = vmatprep.subr.bf16.mxu0 0
      %1031 = vmatpush1.bf16.msra.mxu0 0
      %1032 = vmatprep.subr.bf16.mxu0 0
      %1033 = vmatpush1.bf16.msra.mxu0 0
      %1034 = vmatprep.subr.bf16.mxu0 0
      %1035 = vmatpush1.bf16.msra.mxu0 0
      %1036 = vmatprep.subr.bf16.mxu0 0
      %1037 = vmatpush1.bf16.msra.mxu0 0
      %1038 = vmatprep.subr.bf16.mxu0 0
      %1039 = vmatpush1.bf16.msra.mxu0 0
      %1040 = vmatprep.subr.bf16.mxu0 %v1024
      %1041 = vmatpush1.bf16.msra.mxu0 %v1021
      %1042 = vmatprep.subr.bf16.mxu0 0
      %1043 = vmatpush2.bf16.msra.mxu0 0
      %1044 = vmatprep.subr.bf16.mxu0 0
      %1045 = vmatpush2.bf16.msra.mxu0 0
      %1046 = vmatprep.subr.bf16.mxu0 0
      %1047 = vmatpush2.bf16.msra.mxu0 0
      %1048 = vmatprep.subr.bf16.mxu0 0
      %1049 = vmatpush2.bf16.msra.mxu0 0
      %1050 = vmatprep.subr.bf16.mxu0 0
      %1051 = vmatpush2.bf16.msra.mxu0 0
      %1052 = vmatprep.subr.bf16.mxu0 0
      %1053 = vmatpush2.bf16.msra.mxu0 0
      %1054 = vmatprep.subr.bf16.mxu0 0
      %1055 = vmatpush2.bf16.msra.mxu0 0
      %1056 = vmatprep.subr.bf16.mxu0 0
      %1057 = vmatpush2.bf16.msra.mxu0 0
      %1058 = vmatprep.mubr.bf16.mxu0 0
      %1059 = vmatmul.mubr.bf16.gmra.mxu0 %v1018
      %v1060 = vpop.f32.mrf.mxu0
      %v1061 = vadd.f32 0.0, %v1060
      %v1062 = vpop.f32.mrf.mxu0
      %v1063 = vadd.f32 0.0, %v1062
      %v1064 = vpop.f32.mrf.mxu0
      %v1065 = vpop.f32.mrf.mxu0
      %1066 = vdwg.mxu0
      %v1067 = vadd.f32 %v931, %v1061
      %v1068 = vadd.f32 %v932, %v1063
      %v1069 = vld [vmem:[%s6] sm:$0xff]
      %1071 = vset.pattern.permute.xlu0 0
      %1072 = vperm.xlu0 %1071, %v1069
      %v1073 = vpop.permute.xlu0 %1072
      %v1075 = vadd.f32 %v1067, %v1073
      %v1076 = vadd.f32 %v1068, %v1073
      %v1077 = vxor.u32 %v1075, 2147483648
      %v1078 = vxor.u32 %v1076, 2147483648
      %v1079 = vmul.f32 %v1077, 1.442695
      %v1080 = vpow.pop %v1079
      %v1081 = vmul.f32 %v1078, 1.442695
      %v1082 = vpow.pop %v1081
      %v1083 = vadd.f32 %v1080, 1.0
      %v1084 = vadd.f32 %v1082, 1.0
      %v1085 = vrcp.pop %v1083
      %v1086 = vmul.f32 1.0, %v1085
      %v1087 = vrcp.pop %v1084
      %v1088 = vmul.f32 1.0, %v1087
      %v1089 = vmul.f32 %v1075, %v1086
      %v1090 = vmul.f32 %v1076, %v1088
      %v1091 = vpack.c.bf16 %v1089, %v1089
      %v1092 = vpack.c.bf16 %v1090, %v1090
      %v1095 = vunpack.c.l.b16 %v1091
      %v1096 = vunpack.c.l.b16 %v1092
      %v1097 = vpack.c.b16 %v1096, %v1095
      %1099 = vst [vmem:[%s403] sm:$0xff] %v1097
      %s1100 = smul.u32 2, %s25
      %p1101 = scmp.lt.s32.totalorder %s24, 1
      %s1102 = scalar_select %p1101, %s24, 1
      %p1103 = scmp.lt.s32.totalorder %s1100, 1
      %s1104 = scalar_select %p1103, %s1100, 1
      %s1105 = smul.addr %s1102, 2
      %s1106 = sadd.s32 %s1104, %s1105
      %s1107 = smul.addr %s1106, 4
      %s1108 = scalar_lea.vmem %s7, %s1107
      %s1109 = smul.u32 2, %s25
      %p1110 = scmp.lt.s32.totalorder %s24, 1
      %s1111 = scalar_select %p1110, %s24, 1
      %p1112 = scmp.lt.s32.totalorder %s1109, 1
      %s1113 = scalar_select %p1112, %s1109, 1
      %s1114 = smul.addr %s1111, 2
      %s1115 = sadd.s32 %s1113, %s1114
      %s1116 = smul.addr %s1115, 4
      %s1117 = scalar_lea.vmem %s8, %s1116
      // Predicated region
      $region49: #{rfsw_forward.2} parent=47 // pred_check
        %p1118 = pneg %p213
      $region50: #{rfsw_forward.2} parent=47 // pred_check_branch
        %1120 = sbr.rel (%p1118) target = $region52
      $region51: #{rfsw_forward.2} parent=47 // pred_region
        %s1121 = smul.u32 2, %s25
      $region52: #{rfsw_forward.2} parent=47 // pred_fallthru
        _
      // Predicated region
      $region53: #{rfsw_forward.2} parent=47 // pred_check
        %p1122 = pneg %p241
      $region54: #{rfsw_forward.2} parent=47 // pred_check_branch
        %1124 = sbr.rel (%p1122) target = $region56
      $region55: #{rfsw_forward.2} parent=47 // pred_region
        %s1125 = smul.u32 2, %s25
      $region56: #{rfsw_forward.2} parent=47 // pred_fallthru
        _
    $region48: #{rfsw_forward.2} parent=5 // pred_fallthru
      _
    %p1126 = scmp.le.s32.totalorder 2, %s15
    // Predicated region
    $region57: #{rfsw_forward.2} parent=5 // pred_check
      %p1127 = pneg %p1126
    $region58: #{rfsw_forward.2} parent=5 // pred_check_branch
      %1129 = sbr.rel (%p1127) target = $region60
    $region59: #{rfsw_forward.2} parent=5 // pred_region
      %s1130 = ssub.s32 %s15, 2
      // Predicated region
      $region61: #{rfsw_forward.2} parent=59 // pred_check
        %p1131 = pneg %p219
      $region62: #{rfsw_forward.2} parent=59 // pred_check_branch
        %1133 = sbr.rel (%p1131) target = $region64
      $region63: #{rfsw_forward.2} parent=59 // pred_region
        %s1134 = smul.u32 2, %s27
        %p1135 = scmp.lt.s32.totalorder %s26, 1
        %s1136 = scalar_select %p1135, %s26, 1
        %p1137 = scmp.lt.s32.totalorder %s1134, 1
        %s1138 = scalar_select %p1137, %s1134, 1
        %s1139 = smul.addr %s1136, 2
        %s1140 = sadd.s32 %s1138, %s1139
        %s1141 = smul.addr %s1140, 4
        %s1142 = scalar_lea.vmem %s7, %s1141
      $region64: #{rfsw_forward.2} parent=59 // pred_fallthru
        _
      // Predicated region
      $region65: #{rfsw_forward.2} parent=59 // pred_check
        %p1143 = pneg %p247
      $region66: #{rfsw_forward.2} parent=59 // pred_check_branch
        %1145 = sbr.rel (%p1143) target = $region68
      $region67: #{rfsw_forward.2} parent=59 // pred_region
        %s1146 = smul.u32 2, %s27
        %p1147 = scmp.lt.s32.totalorder %s26, 1
        %s1148 = scalar_select %p1147, %s26, 1
        %p1149 = scmp.lt.s32.totalorder %s1146, 1
        %s1150 = scalar_select %p1149, %s1146, 1
        %s1151 = smul.addr %s1148, 2
        %s1152 = sadd.s32 %s1150, %s1151
        %s1153 = smul.addr %s1152, 4
        %s1154 = scalar_lea.vmem %s8, %s1153
      $region68: #{rfsw_forward.2} parent=59 // pred_fallthru
        _
    $region60: #{rfsw_forward.2} parent=5 // pred_fallthru
      _
  $region6: #{rfsw_forward.2} parent=0 // loop_footer
    %s19 = sadd.s32 1, %s15
  $region7: #{rfsw_forward.2} parent=0 // loop_footer_branch
    %14 = sbr.rel target = $region3
  $region8: #{rfsw_forward.2} parent=0 // loop_exit
    _

</llo_original>
